<compile_context>
chip_gen: v5e
topology: v5e:2x2
jax: 0.10.0
libtpu: 0.0.40
codegen_flags: <defaults>
</compile_context>

<pallas_src>
import math

import jax
import jax.numpy as jnp
from jax.experimental import pallas as pl
from jax.experimental.pallas import tpu as pltpu


# --------------------------------------------------------------------------------------
# Kernel
# --------------------------------------------------------------------------------------
def _fusion_kernel(a_ref, v_ref, l_ref, wt_ref, bt_ref, wv_ref, bw_ref, o_ref):
    """One batch tile: transform matmul(s) + VPU scoring + 3-way softmax + weighted sum."""
    tb, embd = a_ref.shape
    inv_sqrt_e = 1.0 / math.sqrt(embd)

    a = a_ref[...]                       # [tB, E] native dtype (bf16-friendly)
    v = v_ref[...]
    l = l_ref[...]

    wt = wt_ref[...]                     # [E, E] resident (grid-invariant) weight
    bt = bt_ref[...].astype(jnp.float32)          # [1, E]
    wv_row = wv_ref[...].astype(jnp.float32)      # [1, E]
    bw = bw_ref[0, 0]                              # scalar from SMEM

    def score(x):
        # transform(): MXU matmul, f32 accumulate; ReLU + Linear(E,1) as VPU mul + XLU reduce.
        h = jnp.dot(x, wt, preferred_element_type=jnp.float32)
        h = jnp.maximum(h + bt, 0.0)
        s = jnp.sum(h * wv_row, axis=-1, keepdims=True)           # [rows, 1]
        return (s + bw) * inv_sqrt_e

    if tb >= 128:
        # Preferred path: three back-to-back matmuls; no [3*tB,E] VMEM copy, less vst traffic.
        s_a = score(a)
        s_v = score(v)
        s_l = score(l)
    else:
        # Tiny-tile fallback: one fused matmul amortizes MXU fill better than 3 small ones.
        x_all = jnp.concatenate([a, v, l], axis=0)                 # [3*tB, E]
        s = score(x_all)
        s_a = s[0 * tb:1 * tb]
        s_v = s[1 * tb:2 * tb]
        s_l = s[2 * tb:3 * tb]

    # --- softmax over the three modality scores (per-row, numerically stable, f32) -------
    m = jnp.maximum(jnp.maximum(s_a, s_v), s_l)
    e_a = jnp.exp(s_a - m)
    e_v = jnp.exp(s_v - m)
    e_l = jnp.exp(s_l - m)
    inv_denom = pl.reciprocal(e_a + e_v + e_l, approx=True)        # EUP slot
    p_a = e_a * inv_denom
    p_v = e_v * inv_denom
    p_l = e_l * inv_denom

    # --- weighted sum ---------------------------------------------------------------------
    if a.dtype == jnp.bfloat16:
        # Native bf16 VPU math on v6e/v7x (half the VALU ops / vreg pressure).
        # TODO(synk): on v5e (no bf16 VALU) an f32 weighted sum would be marginally better.
        out = (a * p_a.astype(a.dtype)
               + v * p_v.astype(a.dtype)
               + l * p_l.astype(a.dtype))
    else:
        out = (a.astype(jnp.float32) * p_a
               + v.astype(jnp.float32) * p_v
               + l.astype(jnp.float32) * p_l)
    o_ref[...] = out.astype(o_ref.dtype)


# --------------------------------------------------------------------------------------
# Wrapper
# --------------------------------------------------------------------------------------
def _ceil_div(a, b):
    return -(-a // b)


def _round_up(a, b):
    return _ceil_div(a, b) * b


def _vmem_capacity_bytes():
    try:
        return int(pltpu.get_tpu_info().vmem_capacity_bytes)
    except Exception:
        return 64 * 1024 * 1024   # conservative fallback (v7x per-TC VMEM)


def modality_fusion_attn(A, V, L, wt, bt, wv, bw, *, block_b=None):
    """A, V, L: [B, E].  wt: [E, E], bt: [1, E], wv: [1, E], bw: [1, 1]."""
    B, E = A.shape
    in_bytes = jnp.dtype(A.dtype).itemsize
    param_bytes = jnp.dtype(wt.dtype).itemsize
    # Sublane alignment for the batch-tile dim: 8 for 32-bit, 16 for bf16, 32 for int8.
    sublane_mult = 8 * max(1, 4 // in_bytes)

    # ---- per-generation VMEM budget ------------------------------------------------------
    phys_vmem = _vmem_capacity_bytes()
    # Use about half the physical VMEM for the pipeline working set; leaves headroom for
    # compiler scratch and keeps the double-buffered footprint well under 64 MiB on v7x.
    tile_budget = max(8 * 1024 * 1024, phys_vmem // 2)

    # Grid-invariant params (wt, bt, wv), conservatively counted double-buffered.
    fixed_bytes = 2 * (E * E + 2 * E) * param_bytes
    # Per batch row: 3 inputs + 1 output, double-buffered, plus ~2 rows of f32 intermediates
    # (the live [tB,E] f32 `h` and the f32 accumulation of the weighted sum).
    per_row_bytes = 2 * 4 * E * in_bytes + 2 * E * 4
    # TODO(synk): for E large enough that an ExE weight cannot stay resident (v7x, E >~ 2048
    # f32), add a trailing 'arbitrary' grid axis tiling the transform output dim.

    if block_b is None:
        rows = (tile_budget - fixed_bytes) // per_row_bytes
        rows = int(max(sublane_mult, min(rows, 1024)))
        rows = (rows // sublane_mult) * sublane_mult
        if rows >= B:
            # Keep at least a 2-step grid so the DMA pipeline has work to overlap and the
            # 'parallel' batch axis can shard across both TensorCores on v7x.
            rows = max(sublane_mult, _round_up(_ceil_div(B, 2), sublane_mult))
        block_b = rows
    block_b = int(block_b)
    assert block_b % sublane_mult == 0, (
        f"block_b={block_b} must be a multiple of {sublane_mult} for dtype {A.dtype}")

    # ---- ragged batch: zero-pad to a tile multiple, slice the result afterwards ----------
    Bp = _round_up(B, block_b)
    if Bp != B:
        pad = ((0, Bp - B), (0, 0))
        A = jnp.pad(A, pad)
        V = jnp.pad(V, pad)
        L = jnp.pad(L, pad)

    grid = (Bp // block_b,)

    mod_spec = pl.BlockSpec((block_b, E), lambda i: (i, 0))
    wt_spec = pl.BlockSpec((E, E), lambda i: (0, 0))                  # grid-invariant weight
    bt_spec = pl.BlockSpec((1, E), lambda i: (0, 0))
    wv_spec = pl.BlockSpec((1, E), lambda i: (0, 0))
    bw_spec = pl.BlockSpec(memory_space=pltpu.MemorySpace.SMEM)       # scalar bias via SMEM

    # VMEM limit derived from the actual working set (not hard-coded), clamped to hardware.
    needed_bytes = fixed_bytes + per_row_bytes * block_b
    vmem_limit = int(min(max(2 * needed_bytes, 16 * 1024 * 1024),
                         max(16 * 1024 * 1024, phys_vmem - 8 * 1024 * 1024)))

    cost = pl.CostEstimate(
        flops=6 * Bp * E * E + 12 * Bp * E,
        transcendentals=4 * Bp,
        bytes_accessed=4 * Bp * E * in_bytes + (E * E + 2 * E + 1) * param_bytes,
    )

    out = pl.pallas_call(
        _fusion_kernel,
        out_shape=jax.ShapeDtypeStruct((Bp, E), A.dtype),
        grid_spec=pltpu.PrefetchScalarGridSpec(
            num_scalar_prefetch=0,
            grid=grid,
            in_specs=[mod_spec, mod_spec, mod_spec,
                      wt_spec, bt_spec, wv_spec, bw_spec],
            out_specs=pl.BlockSpec((block_b, E), lambda i: (i, 0)),
        ),
        compiler_params=pltpu.CompilerParams(
            dimension_semantics=("parallel",),
            vmem_limit_bytes=vmem_limit,
        ),
        cost_estimate=cost,
    )(A, V, L, wt, bt, wv, bw)

    return out[:B] if Bp != B else out


# --------------------------------------------------------------------------------------
# Pure-JAX reference (matches the PyTorch forward)
# --------------------------------------------------------------------------------------
def _reference(A, V, L, wt, bt, wv, bw):
    E = A.shape[-1]

    def score(x):
        h = jnp.maximum(x @ wt + bt, 0.0)
        return h @ wv.T + bw  # [B, 1]

    s = jnp.concatenate([score(A), score(V), score(L)], axis=1) / math.sqrt(E)
    p = jax.nn.softmax(s, axis=1)
    return A * p[:, 0:1] + V * p[:, 1:2] + L * p[:, 2:3]


if __name__ == "__main__":
    E = 128  # module default embd

    key = jax.random.PRNGKey(0)
    kA, kV, kL, kWt, kbt, kWv, kbw = jax.random.split(key, 7)

    # Deterministic synthetic parameters (~ torch Linear init scale 1/sqrt(fan_in)).
    scale = 1.0 / math.sqrt(E)
    wt = jax.random.uniform(kWt, (E, E), jnp.float32, -scale, scale)   # transform weight (transposed)
    bt = jax.random.uniform(kbt, (1, E), jnp.float32, -scale, scale)   # transform bias
    bw = jax.random.uniform(kbw, (1, 1), jnp.float32, -scale, scale)   # w bias
    wv = jax.random.uniform(kWv, (1, E), jnp.float32, -scale, scale)   # w weight (torch layout)

    # Tolerance is loose enough for the approximate (EUP) reciprocal in the softmax.
    TOL = 3e-3

    # Case 1: B=256 -> auto block_b picks 128 (2-step grid), exercising the
    # no-concat three-matmul path and the DMA/compute pipeline.
    B1 = 256
    A1 = jax.random.normal(kA, (B1, E), dtype=jnp.float32)
    V1 = jax.random.normal(kV, (B1, E), dtype=jnp.float32)
    L1 = jax.random.normal(kL, (B1, E), dtype=jnp.float32)
    out1 = jax.block_until_ready(modality_fusion_attn(A1, V1, L1, wt, bt, wv, bw))
    ref1 = _reference(A1, V1, L1, wt, bt, wv, bw)
    assert out1.shape == (B1, E)
    assert jnp.allclose(out1, ref1, atol=TOL, rtol=TOL), "mismatch vs reference (case 1)"

    # Case 2: ragged batch (B=50, not a tile multiple) -> padding path + tiny-tile
    # concat fallback.
    B2 = 50
    A2 = jax.random.normal(kA, (B2, E), dtype=jnp.float32)
    V2 = jax.random.normal(kV, (B2, E), dtype=jnp.float32)
    L2 = jax.random.normal(kL, (B2, E), dtype=jnp.float32)
    out2 = jax.block_until_ready(modality_fusion_attn(A2, V2, L2, wt, bt, wv, bw))
    ref2 = _reference(A2, V2, L2, wt, bt, wv, bw)
    assert out2.shape == (B2, E)
    assert jnp.allclose(out2, ref2, atol=TOL, rtol=TOL), "mismatch vs reference (case 2)"

    print("KERNEL_OK")
</pallas_src>

<mosaic_0001>
module attributes {stable_mosaic.version = 11 : i64} {
  func.func @_fusion_kernel(%arg0: i32, %arg1: memref<128x128xf32, #tpu.memory_space<vmem>>, %arg2: memref<128x128xf32, #tpu.memory_space<vmem>>, %arg3: memref<128x128xf32, #tpu.memory_space<vmem>>, %arg4: memref<128x128xf32, #tpu.memory_space<vmem>>, %arg5: memref<1x128xf32, #tpu.memory_space<vmem>>, %arg6: memref<1x128xf32, #tpu.memory_space<vmem>>, %arg7: memref<1x1xf32, #tpu.memory_space<smem>>, %arg8: memref<128x128xf32, #tpu.memory_space<vmem>>) attributes {dimension_semantics = [#tpu.dimension_semantics<parallel>], iteration_bounds = array<i64: 2>, scalar_prefetch = 0 : i64, scratch_operands = 0 : i64, tpu.core_type = #tpu.core_type<tc>, window_params = [{transform_indices = @transform_0, window_bounds = array<i64: 128, 128>}, {transform_indices = @transform_1, window_bounds = array<i64: 128, 128>}, {transform_indices = @transform_2, window_bounds = array<i64: 128, 128>}, {pipeline_mode = #tpu.pipeline_mode<synchronous>, transform_indices = @transform_3, window_bounds = array<i64: 128, 128>}, {pipeline_mode = #tpu.pipeline_mode<synchronous>, transform_indices = @transform_4, window_bounds = array<i64: 1, 128>}, {pipeline_mode = #tpu.pipeline_mode<synchronous>, transform_indices = @transform_5, window_bounds = array<i64: 1, 128>}, {transform_indices = @transform_6, window_bounds = array<i64: 1, 1>}, {transform_indices = @transform_7, window_bounds = array<i64: 128, 128>}]} {
    %c0 = arith.constant 0 : index
    %c0_0 = arith.constant 0 : index
    %0 = vector.load %arg1[%c0, %c0_0] : memref<128x128xf32, #tpu.memory_space<vmem>>, vector<128x128xf32>
    %c0_1 = arith.constant 0 : index
    %c0_2 = arith.constant 0 : index
    %1 = vector.load %arg2[%c0_1, %c0_2] : memref<128x128xf32, #tpu.memory_space<vmem>>, vector<128x128xf32>
    %c0_3 = arith.constant 0 : index
    %c0_4 = arith.constant 0 : index
    %2 = vector.load %arg3[%c0_3, %c0_4] : memref<128x128xf32, #tpu.memory_space<vmem>>, vector<128x128xf32>
    %c0_5 = arith.constant 0 : index
    %c0_6 = arith.constant 0 : index
    %3 = vector.load %arg4[%c0_5, %c0_6] : memref<128x128xf32, #tpu.memory_space<vmem>>, vector<128x128xf32>
    %c0_7 = arith.constant 0 : index
    %c0_8 = arith.constant 0 : index
    %4 = vector.load %arg5[%c0_7, %c0_8] : memref<1x128xf32, #tpu.memory_space<vmem>>, vector<1x128xf32>
    %c0_9 = arith.constant 0 : index
    %c0_10 = arith.constant 0 : index
    %5 = vector.load %arg6[%c0_9, %c0_10] : memref<1x128xf32, #tpu.memory_space<vmem>>, vector<1x128xf32>
    %c0_11 = arith.constant 0 : index
    %c0_12 = arith.constant 0 : index
    %6 = memref.load %arg7[%c0_11, %c0_12] : memref<1x1xf32, #tpu.memory_space<smem>>
    %cst = arith.constant dense<0.000000e+00> : vector<128x128xf32>
    %7 = tpu.matmul %0, %3, %cst {dimension_numbers = #tpu.dot_dimension_numbers<[1], [0], [0], [1], [0, 0, 1, 1], [], []>} : vector<128x128xf32>, vector<128x128xf32>, vector<128x128xf32> -> vector<128x128xf32>
    %8 = vector.broadcast %4 : vector<1x128xf32> to vector<128x128xf32>
    %9 = arith.addf %7, %8 : vector<128x128xf32>
    %cst_13 = arith.constant 0.000000e+00 : f32
    %10 = vector.broadcast %cst_13 : f32 to vector<128x128xf32>
    %11 = arith.maximumf %9, %10 : vector<128x128xf32>
    %12 = vector.broadcast %5 : vector<1x128xf32> to vector<128x128xf32>
    %13 = arith.mulf %11, %12 : vector<128x128xf32>
    %cst_14 = arith.constant dense<0.000000e+00> : vector<128xf32>
    %14 = vector.multi_reduction <add>, %13, %cst_14 [1] : vector<128x128xf32> to vector<128xf32>
    %15 = vector.shape_cast %14 : vector<128xf32> to vector<128x1xf32>
    %16 = vector.broadcast %6 : f32 to vector<128x1xf32>
    %17 = arith.addf %15, %16 : vector<128x1xf32>
    %cst_15 = arith.constant 0.0883883461 : f32
    %18 = vector.broadcast %cst_15 : f32 to vector<128x1xf32>
    %19 = arith.mulf %17, %18 : vector<128x1xf32>
    %cst_16 = arith.constant dense<0.000000e+00> : vector<128x128xf32>
    %20 = tpu.matmul %1, %3, %cst_16 {dimension_numbers = #tpu.dot_dimension_numbers<[1], [0], [0], [1], [0, 0, 1, 1], [], []>} : vector<128x128xf32>, vector<128x128xf32>, vector<128x128xf32> -> vector<128x128xf32>
    %21 = vector.broadcast %4 : vector<1x128xf32> to vector<128x128xf32>
    %22 = arith.addf %20, %21 : vector<128x128xf32>
    %cst_17 = arith.constant 0.000000e+00 : f32
    %23 = vector.broadcast %cst_17 : f32 to vector<128x128xf32>
    %24 = arith.maximumf %22, %23 : vector<128x128xf32>
    %25 = vector.broadcast %5 : vector<1x128xf32> to vector<128x128xf32>
    %26 = arith.mulf %24, %25 : vector<128x128xf32>
    %cst_18 = arith.constant dense<0.000000e+00> : vector<128xf32>
    %27 = vector.multi_reduction <add>, %26, %cst_18 [1] : vector<128x128xf32> to vector<128xf32>
    %28 = vector.shape_cast %27 : vector<128xf32> to vector<128x1xf32>
    %29 = vector.broadcast %6 : f32 to vector<128x1xf32>
    %30 = arith.addf %28, %29 : vector<128x1xf32>
    %cst_19 = arith.constant 0.0883883461 : f32
    %31 = vector.broadcast %cst_19 : f32 to vector<128x1xf32>
    %32 = arith.mulf %30, %31 : vector<128x1xf32>
    %cst_20 = arith.constant dense<0.000000e+00> : vector<128x128xf32>
    %33 = tpu.matmul %2, %3, %cst_20 {dimension_numbers = #tpu.dot_dimension_numbers<[1], [0], [0], [1], [0, 0, 1, 1], [], []>} : vector<128x128xf32>, vector<128x128xf32>, vector<128x128xf32> -> vector<128x128xf32>
    %34 = vector.broadcast %4 : vector<1x128xf32> to vector<128x128xf32>
    %35 = arith.addf %33, %34 : vector<128x128xf32>
    %cst_21 = arith.constant 0.000000e+00 : f32
    %36 = vector.broadcast %cst_21 : f32 to vector<128x128xf32>
    %37 = arith.maximumf %35, %36 : vector<128x128xf32>
    %38 = vector.broadcast %5 : vector<1x128xf32> to vector<128x128xf32>
    %39 = arith.mulf %37, %38 : vector<128x128xf32>
    %cst_22 = arith.constant dense<0.000000e+00> : vector<128xf32>
    %40 = vector.multi_reduction <add>, %39, %cst_22 [1] : vector<128x128xf32> to vector<128xf32>
    %41 = vector.shape_cast %40 : vector<128xf32> to vector<128x1xf32>
    %42 = vector.broadcast %6 : f32 to vector<128x1xf32>
    %43 = arith.addf %41, %42 : vector<128x1xf32>
    %cst_23 = arith.constant 0.0883883461 : f32
    %44 = vector.broadcast %cst_23 : f32 to vector<128x1xf32>
    %45 = arith.mulf %43, %44 : vector<128x1xf32>
    %46 = arith.maximumf %19, %32 : vector<128x1xf32>
    %47 = arith.maximumf %46, %45 : vector<128x1xf32>
    %48 = arith.subf %19, %47 : vector<128x1xf32>
    %49 = math.exp %48 : vector<128x1xf32>
    %50 = arith.subf %32, %47 : vector<128x1xf32>
    %51 = math.exp %50 : vector<128x1xf32>
    %52 = arith.subf %45, %47 : vector<128x1xf32>
    %53 = math.exp %52 : vector<128x1xf32>
    %54 = arith.addf %49, %51 : vector<128x1xf32>
    %55 = arith.addf %54, %53 : vector<128x1xf32>
    %56 = tpu.reciprocal %55 {approx = true} : vector<128x1xf32> -> vector<128x1xf32>
    %57 = arith.mulf %49, %56 : vector<128x1xf32>
    %58 = arith.mulf %51, %56 : vector<128x1xf32>
    %59 = arith.mulf %53, %56 : vector<128x1xf32>
    %60 = vector.broadcast %57 : vector<128x1xf32> to vector<128x128xf32>
    %61 = arith.mulf %0, %60 : vector<128x128xf32>
    %62 = vector.broadcast %58 : vector<128x1xf32> to vector<128x128xf32>
    %63 = arith.mulf %1, %62 : vector<128x128xf32>
    %64 = arith.addf %61, %63 : vector<128x128xf32>
    %65 = vector.broadcast %59 : vector<128x1xf32> to vector<128x128xf32>
    %66 = arith.mulf %2, %65 : vector<128x128xf32>
    %67 = arith.addf %64, %66 : vector<128x128xf32>
    %c0_24 = arith.constant 0 : index
    %c0_25 = arith.constant 0 : index
    %68 = vector.load %arg8[%c0_24, %c0_25] : memref<128x128xf32, #tpu.memory_space<vmem>>, vector<128x128xf32>
    tpu.vector_store %arg8[%c0_24, %c0_25], %67 {strides = array<i32>} : memref<128x128xf32, #tpu.memory_space<vmem>>, vector<128x128xf32>,
    return
  }
  func.func @transform_0(%arg0: i32) -> (i32, i32) {
    %c0_i32 = arith.constant 0 : i32
    %c0_i32_0 = arith.constant 0 : i32
    return %arg0, %c0_i32 : i32, i32
  }
  func.func @transform_1(%arg0: i32) -> (i32, i32) {
    %c0_i32 = arith.constant 0 : i32
    %c0_i32_0 = arith.constant 0 : i32
    return %arg0, %c0_i32 : i32, i32
  }
  func.func @transform_2(%arg0: i32) -> (i32, i32) {
    %c0_i32 = arith.constant 0 : i32
    %c0_i32_0 = arith.constant 0 : i32
    return %arg0, %c0_i32 : i32, i32
  }
  func.func @transform_3(%arg0: i32) -> (i32, i32) {
    %c0_i32 = arith.constant 0 : i32
    %c0_i32_0 = arith.constant 0 : i32
    %c0_i32_1 = arith.constant 0 : i32
    return %c0_i32, %c0_i32_0 : i32, i32
  }
  func.func @transform_4(%arg0: i32) -> (i32, i32) {
    %c0_i32 = arith.constant 0 : i32
    %c0_i32_0 = arith.constant 0 : i32
    %c0_i32_1 = arith.constant 0 : i32
    return %c0_i32, %c0_i32_0 : i32, i32
  }
  func.func @transform_5(%arg0: i32) -> (i32, i32) {
    %c0_i32 = arith.constant 0 : i32
    %c0_i32_0 = arith.constant 0 : i32
    %c0_i32_1 = arith.constant 0 : i32
    return %c0_i32, %c0_i32_0 : i32, i32
  }
  func.func @transform_6(%arg0: i32) -> (i32, i32) {
    %c0_i32 = arith.constant 0 : i32
    %c0_i32_0 = arith.constant 0 : i32
    %c0_i32_1 = arith.constant 0 : i32
    return %c0_i32, %c0_i32_0 : i32, i32
  }
  func.func @transform_7(%arg0: i32) -> (i32, i32) {
    %c0_i32 = arith.constant 0 : i32
    %c0_i32_0 = arith.constant 0 : i32
    return %arg0, %c0_i32 : i32, i32
  }
}

</mosaic_0001>

<llo_original>
// kernel: tpu_custom_call.1
$region0: #{tpu_custom_call.1}
  #allocation0 [shape = 'u32[]', space=smem, size = 0x4, offset = 0x4, fixed_abs, tag = 'smem constant byte address 0x4 - core index']
  #allocation1 [shape = 'u32[72,128]{1,0:T(1,128)}', space=vmem, size = 0x9000, scoped, tag = 'internal scratch']
  #allocation2 [shape = 'f32[1,1]{1,0:T(1,128)S(6)}', space=smem, size = 0x200, scoped, tag = 'scoped memory for tpu_custom_call.1']
  %s0 = inlined_call_operand.hbm [shape: f32[256,128], index: 0, kind: input, shape index: {}]
  %s1 = inlined_call_operand.hbm [shape: f32[256,128], index: 1, kind: input, shape index: {}]
  %s2 = inlined_call_operand.hbm [shape: f32[256,128], index: 2, kind: input, shape index: {}]
  %s3 = inlined_call_operand.hbm [shape: f32[128,128], index: 3, kind: input, shape index: {}]
  %s4 = inlined_call_operand.vmem [shape: f32[1,128], index: 4, kind: input, shape index: {}]
  %s5 = inlined_call_operand.vmem [shape: f32[1,128], index: 5, kind: input, shape index: {}]
  %s6 = inlined_call_operand.<no memory space> [shape: f32[1,1], index: 6, kind: input, shape index: {}]
  %s7 = inlined_call_operand.hbm [shape: f32[256,128], index: 7, kind: output, shape index: {}]
  %s8 = sld [smem:[#allocation0]]
  $region77: #{tpu_custom_call.1} parent=0
    _
  %s10 = ssub.s32 1, %s8
  %s11 = scalar_select 0, %s10, %s8
  %12 = sst [smem:[#allocation2]] %s6
  $region1: #{tpu_custom_call.1} parent=0
    #allocation3 [shape = 'u8[131072]{0}', space=vmem, size = 0x20000, scoped, tag = 'input window, operand 0']
    #allocation4 [shape = 's32[2]{0}', space=sflag, size = 0x8, scoped, tag = 'scoped memory for tpu_custom_call.1']
    #allocation5 [shape = 's32[2]{0}', space=sflag, size = 0x8, scoped, tag = 'scoped memory for tpu_custom_call.1']
    #allocation6 [shape = 'u8[131072]{0}', space=vmem, size = 0x20000, scoped, tag = 'input window, operand 1']
    #allocation7 [shape = 's32[2]{0}', space=sflag, size = 0x8, scoped, tag = 'scoped memory for tpu_custom_call.1']
    #allocation8 [shape = 'u8[131072]{0}', space=vmem, size = 0x20000, scoped, tag = 'input window, operand 2']
    #allocation9 [shape = 'u8[65536]{0}', space=vmem, size = 0x10000, scoped, tag = 'input window, operand 3, single buffered']
    #allocation10 [shape = 's32[1]{0}', space=sflag, size = 0x4, scoped, tag = 'scoped memory for tpu_custom_call.1']
    #allocation11 [shape = 'u8[131072]{0}', space=vmem, size = 0x20000, scoped, tag = 'output window, operand 0']
    %13 = vsyncpa [#allocation4], 0
    %s14 = scalar_lea.sflag [#allocation4], 1
    %15 = vsyncpa %s14, 0
    %16 = vsyncpa [#allocation7], 0
    %s17 = scalar_lea.sflag [#allocation7], 1
    %18 = vsyncpa %s17, 0
    %19 = vsyncpa [#allocation10], 0
    %20 = vsyncpa [#allocation5], 0
    %s21 = scalar_lea.sflag [#allocation5], 1
    %22 = vsyncpa %s21, 0
    loop: start=0, step=1, limit=4
    $region2: #{tpu_custom_call.1} parent=1 // loop_pre_header
      _
    $region3: #{tpu_custom_call.1} parent=1 // loop_header
      %s24 = sphi 0, %s28
      %p25 = scmp.ge.s32.totalorder %s24, 4
      %s34 = sphi 0, %s36
      %s37 = sphi 0, %s34
      %s38 = sphi 0, %s37
      %s54 = sphi 0, %s38
      %s60 = sphi 0, %s62
      %s63 = sphi 0, %s60
      %s64 = sphi 0, %s63
      %s80 = sphi 0, %s64
      %s86 = sphi 0, %s88
      %s89 = sphi 0, %s86
      %s90 = sphi 0, %s89
      %s106 = sphi 0, %s90
      %s110 = sphi 0, %s110
      %s112 = sphi 0, %s110
      %s113 = sphi 0, %s112
      %s127 = sphi 0, %s113
      %s131 = sphi 0, %s131
      %s133 = sphi 0, %s131
      %s134 = sphi 0, %s133
      %s148 = sphi 0, %s134
      %s152 = sphi 0, %s152
      %s154 = sphi 0, %s152
      %s155 = sphi 0, %s154
      %s169 = sphi 0, %s155
      %s173 = sphi 0, %s173
      %s175 = sphi 0, %s173
      %s176 = sphi 0, %s175
      %s190 = sphi 0, %s176
      %s196 = sphi 0, %s198
      %s199 = sphi 0, %s196
      %s200 = sphi 0, %s199
      %s216 = sphi 0, %s200
    $region4: #{tpu_custom_call.1} parent=1 // loop_header_branch
      %27 = sbr.rel (%p25) target = $region8
    $region5: #{tpu_custom_call.1} parent=1 // loop_body
      %s29 = ssub.s32 %s24, 1
      %s30 = ssub.s32 %s24, 2
      %s31 = sadd.s32 %s24, 1
      %s32 = ssub.s32 %s24, %s31
      %p33 = scmp.eq.s32.totalorder %s32, 0
      %s35 = sadd.s32 %s34, 1
      %s36 = scalar_select %p33, %s34, %s35
      %p39 = pneg %p33
      %p40 = scmp.eq.s32.totalorder %s24, 1
      %p41 = por %p39, %p40
      %p42 = scmp.ne.s32.totalorder %s34, %s37
      %p43 = scmp.eq.s32.totalorder %s24, 0
      %p44 = por %p42, %p43
      %p45 = scmp.ne.s32.totalorder %s34, %s37
      %p46 = scmp.eq.s32.totalorder %s29, 1
      %p47 = por %p45, %p46
      %p48 = scmp.ne.s32.totalorder %s37, %s38
      %p49 = scmp.eq.s32.totalorder %s29, 0
      %p50 = por %p48, %p49
      %p51 = scmp.ne.s32.totalorder %s37, %s38
      %p52 = scmp.eq.s32.totalorder %s30, 1
      %p53 = por %p51, %p52
      %p55 = scmp.ne.s32.totalorder %s38, %s54
      %p56 = scmp.eq.s32.totalorder %s30, 0
      %p57 = por %p55, %p56
      %s58 = ssub.s32 %s24, %s31
      %p59 = scmp.eq.s32.totalorder %s58, 0
      %s61 = sadd.s32 %s60, 1
      %s62 = scalar_select %p59, %s60, %s61
      %p65 = pneg %p59
      %p66 = scmp.eq.s32.totalorder %s24, 1
      %p67 = por %p65, %p66
      %p68 = scmp.ne.s32.totalorder %s60, %s63
      %p69 = scmp.eq.s32.totalorder %s24, 0
      %p70 = por %p68, %p69
      %p71 = scmp.ne.s32.totalorder %s60, %s63
      %p72 = scmp.eq.s32.totalorder %s29, 1
      %p73 = por %p71, %p72
      %p74 = scmp.ne.s32.totalorder %s63, %s64
      %p75 = scmp.eq.s32.totalorder %s29, 0
      %p76 = por %p74, %p75
      %p77 = scmp.ne.s32.totalorder %s63, %s64
      %p78 = scmp.eq.s32.totalorder %s30, 1
      %p79 = por %p77, %p78
      %p81 = scmp.ne.s32.totalorder %s64, %s80
      %p82 = scmp.eq.s32.totalorder %s30, 0
      %p83 = por %p81, %p82
      %s84 = ssub.s32 %s24, %s31
      %p85 = scmp.eq.s32.totalorder %s84, 0
      %s87 = sadd.s32 %s86, 1
      %s88 = scalar_select %p85, %s86, %s87
      %p91 = pneg %p85
      %p92 = scmp.eq.s32.totalorder %s24, 1
      %p93 = por %p91, %p92
      %p94 = scmp.ne.s32.totalorder %s86, %s89
      %p95 = scmp.eq.s32.totalorder %s24, 0
      %p96 = por %p94, %p95
      %p97 = scmp.ne.s32.totalorder %s86, %s89
      %p98 = scmp.eq.s32.totalorder %s29, 1
      %p99 = por %p97, %p98
      %p100 = scmp.ne.s32.totalorder %s89, %s90
      %p101 = scmp.eq.s32.totalorder %s29, 0
      %p102 = por %p100, %p101
      %p103 = scmp.ne.s32.totalorder %s89, %s90
      %p104 = scmp.eq.s32.totalorder %s30, 1
      %p105 = por %p103, %p104
      %p107 = scmp.ne.s32.totalorder %s90, %s106
      %p108 = scmp.eq.s32.totalorder %s30, 0
      %p109 = por %p107, %p108
      %s111 = sadd.s32 %s110, 1
      %p114 = scmp.eq.s32.totalorder %s24, 1
      %p115 = scmp.ne.s32.totalorder %s110, %s112
      %p116 = scmp.eq.s32.totalorder %s24, 0
      %p117 = por %p115, %p116
      %p118 = scmp.ne.s32.totalorder %s110, %s112
      %p119 = scmp.eq.s32.totalorder %s29, 1
      %p120 = por %p118, %p119
      %p121 = scmp.ne.s32.totalorder %s112, %s113
      %p122 = scmp.eq.s32.totalorder %s29, 0
      %p123 = por %p121, %p122
      %p124 = scmp.ne.s32.totalorder %s112, %s113
      %p125 = scmp.eq.s32.totalorder %s30, 1
      %p126 = por %p124, %p125
      %p128 = scmp.ne.s32.totalorder %s113, %s127
      %p129 = scmp.eq.s32.totalorder %s30, 0
      %p130 = por %p128, %p129
      %s132 = sadd.s32 %s131, 1
      %p135 = scmp.eq.s32.totalorder %s24, 1
      %p136 = scmp.ne.s32.totalorder %s131, %s133
      %p137 = scmp.eq.s32.totalorder %s24, 0
      %p138 = por %p136, %p137
      %p139 = scmp.ne.s32.totalorder %s131, %s133
      %p140 = scmp.eq.s32.totalorder %s29, 1
      %p141 = por %p139, %p140
      %p142 = scmp.ne.s32.totalorder %s133, %s134
      %p143 = scmp.eq.s32.totalorder %s29, 0
      %p144 = por %p142, %p143
      %p145 = scmp.ne.s32.totalorder %s133, %s134
      %p146 = scmp.eq.s32.totalorder %s30, 1
      %p147 = por %p145, %p146
      %p149 = scmp.ne.s32.totalorder %s134, %s148
      %p150 = scmp.eq.s32.totalorder %s30, 0
      %p151 = por %p149, %p150
      %s153 = sadd.s32 %s152, 1
      %p156 = scmp.eq.s32.totalorder %s24, 1
      %p157 = scmp.ne.s32.totalorder %s152, %s154
      %p158 = scmp.eq.s32.totalorder %s24, 0
      %p159 = por %p157, %p158
      %p160 = scmp.ne.s32.totalorder %s152, %s154
      %p161 = scmp.eq.s32.totalorder %s29, 1
      %p162 = por %p160, %p161
      %p163 = scmp.ne.s32.totalorder %s154, %s155
      %p164 = scmp.eq.s32.totalorder %s29, 0
      %p165 = por %p163, %p164
      %p166 = scmp.ne.s32.totalorder %s154, %s155
      %p167 = scmp.eq.s32.totalorder %s30, 1
      %p168 = por %p166, %p167
      %p170 = scmp.ne.s32.totalorder %s155, %s169
      %p171 = scmp.eq.s32.totalorder %s30, 0
      %p172 = por %p170, %p171
      %s174 = sadd.s32 %s173, 1
      %p177 = scmp.eq.s32.totalorder %s24, 1
      %p178 = scmp.ne.s32.totalorder %s173, %s175
      %p179 = scmp.eq.s32.totalorder %s24, 0
      %p180 = por %p178, %p179
      %p181 = scmp.ne.s32.totalorder %s173, %s175
      %p182 = scmp.eq.s32.totalorder %s29, 1
      %p183 = por %p181, %p182
      %p184 = scmp.ne.s32.totalorder %s175, %s176
      %p185 = scmp.eq.s32.totalorder %s29, 0
      %p186 = por %p184, %p185
      %p187 = scmp.ne.s32.totalorder %s175, %s176
      %p188 = scmp.eq.s32.totalorder %s30, 1
      %p189 = por %p187, %p188
      %p191 = scmp.ne.s32.totalorder %s176, %s190
      %p192 = scmp.eq.s32.totalorder %s30, 0
      %p193 = por %p191, %p192
      %s194 = ssub.s32 %s24, %s31
      %p195 = scmp.eq.s32.totalorder %s194, 0
      %s197 = sadd.s32 %s196, 1
      %s198 = scalar_select %p195, %s196, %s197
      %p201 = pneg %p195
      %p202 = scmp.eq.s32.totalorder %s24, 1
      %p203 = por %p201, %p202
      %p204 = scmp.ne.s32.totalorder %s196, %s199
      %p205 = scmp.eq.s32.totalorder %s24, 0
      %p206 = por %p204, %p205
      %p207 = scmp.ne.s32.totalorder %s196, %s199
      %p208 = scmp.eq.s32.totalorder %s29, 1
      %p209 = por %p207, %p208
      %p210 = scmp.ne.s32.totalorder %s199, %s200
      %p211 = scmp.eq.s32.totalorder %s29, 0
      %p212 = por %p210, %p211
      %p213 = scmp.ne.s32.totalorder %s199, %s200
      %p214 = scmp.eq.s32.totalorder %s30, 1
      %p215 = por %p213, %p214
      %p217 = scmp.ne.s32.totalorder %s200, %s216
      %p218 = scmp.eq.s32.totalorder %s30, 0
      %p219 = por %p217, %p218
      %p220 = scmp.le.s32.totalorder 1, %s24
      %p221 = scmp.lt.s32.totalorder %s24, 3
      %p222 = pnand %p220, %p221
      %p223 = pneg %p222
      // Predicated region
      $region9: #{tpu_custom_call.1} parent=5 // pred_check
        _
      $region10: #{tpu_custom_call.1} parent=5 // pred_check_branch
        %225 = sbr.rel (%p222) target = $region12
      $region11: #{tpu_custom_call.1} parent=5 // pred_region
        %s226 = ssub.s32 %s24, 1
        // Predicated region
        $region13: #{tpu_custom_call.1} parent=11 // pred_check
          %p227 = pneg %p123
        $region14: #{tpu_custom_call.1} parent=11 // pred_check_branch
          %229 = sbr.rel (%p227) target = $region16
        $region15: #{tpu_custom_call.1} parent=11 // pred_region
          %231 = vsyncadd [#allocation10], 0
          %s232 = sshll.u32 %s3, 4
          %s233 = int_to_ptr.hbm [resolvable:$true] %s232
          %s234 = sshll.u32 [#allocation9], 4
          %s235 = int_to_ptr.vmem [resolvable:$true] %s234
          %240 = dma.hbm_to_vmem [thread:$0]  %s233, 2048, %s235, [#allocation10], 128, 128, 8
        $region16: #{tpu_custom_call.1} parent=11 // pred_fallthru
          _
        // Predicated region
        $region17: #{tpu_custom_call.1} parent=11 // pred_check
          %p241 = pneg %p144
        $region18: #{tpu_custom_call.1} parent=11 // pred_check_branch
          %243 = sbr.rel (%p241) target = $region20
        $region19: #{tpu_custom_call.1} parent=11 // pred_region
          _
        $region20: #{tpu_custom_call.1} parent=11 // pred_fallthru
          _
        // Predicated region
        $region21: #{tpu_custom_call.1} parent=11 // pred_check
          %p244 = pneg %p165
        $region22: #{tpu_custom_call.1} parent=11 // pred_check_branch
          %246 = sbr.rel (%p244) target = $region24
        $region23: #{tpu_custom_call.1} parent=11 // pred_region
          _
        $region24: #{tpu_custom_call.1} parent=11 // pred_fallthru
          _
        // Predicated region
        $region25: #{tpu_custom_call.1} parent=11 // pred_check
          %p247 = pneg %p186
        $region26: #{tpu_custom_call.1} parent=11 // pred_check_branch
          %249 = sbr.rel (%p247) target = $region28
        $region27: #{tpu_custom_call.1} parent=11 // pred_region
          _
        $region28: #{tpu_custom_call.1} parent=11 // pred_fallthru
          _
      $region12: #{tpu_custom_call.1} parent=5 // pred_fallthru
        _
      %p250 = scmp.lt.s32.totalorder %s24, 2
      // Predicated region
      $region29: #{tpu_custom_call.1} parent=5 // pred_check
        %p251 = pneg %p250
      $region30: #{tpu_custom_call.1} parent=5 // pred_check_branch
        %253 = sbr.rel (%p251) target = $region32
      $region31: #{tpu_custom_call.1} parent=5 // pred_region
        // Predicated region
        $region33: #{tpu_custom_call.1} parent=31 // pred_check
          %p254 = pneg %p44
        $region34: #{tpu_custom_call.1} parent=31 // pred_check_branch
          %256 = sbr.rel (%p254) target = $region36
        $region35: #{tpu_custom_call.1} parent=31 // pred_region
          %s257 = sand.u32 %s34, 1
          %s258 = scalar_lea.sflag [#allocation4], %s257
          %s259 = sand.u32 %s34, 1
          %s260 = smul.addr %s259, 128
          %s261 = scalar_lea.vmem [#allocation3], %s260
          %s262 = smul.u32 16, %s24
          %264 = vsyncadd %s258, 0
          %s265 = smul.addr %s262, 8
          %s266 = scalar_lea.hbm %s0, %s265
          %s267 = sshll.u32 %s266, 4
          %s268 = int_to_ptr.hbm [resolvable:$true] %s267
          %s269 = sshll.u32 %s261, 4
          %s270 = int_to_ptr.vmem [resolvable:$true] %s269
          %275 = dma.hbm_to_vmem [thread:$0]  %s268, 2048, %s270, %s258, 128, 128, 8
        $region36: #{tpu_custom_call.1} parent=31 // pred_fallthru
          _
        // Predicated region
        $region37: #{tpu_custom_call.1} parent=31 // pred_check
          %p276 = pneg %p70
        $region38: #{tpu_custom_call.1} parent=31 // pred_check_branch
          %278 = sbr.rel (%p276) target = $region40
        $region39: #{tpu_custom_call.1} parent=31 // pred_region
          %s279 = sand.u32 %s24, 1
          %s280 = scalar_lea.sflag [#allocation7], %s279
          %s281 = sand.u32 %s60, 1
          %s282 = smul.addr %s281, 128
          %s283 = scalar_lea.vmem [#allocation6], %s282
          %s284 = smul.u32 16, %s24
          %286 = vsyncadd %s280, 0
          %s287 = smul.addr %s284, 8
          %s288 = scalar_lea.hbm %s1, %s287
          %s289 = sshll.u32 %s288, 4
          %s290 = int_to_ptr.hbm [resolvable:$true] %s289
          %s291 = sshll.u32 %s283, 4
          %s292 = int_to_ptr.vmem [resolvable:$true] %s291
          %297 = dma.hbm_to_vmem [thread:$0]  %s290, 2048, %s292, %s280, 128, 128, 8
        $region40: #{tpu_custom_call.1} parent=31 // pred_fallthru
          _
        // Predicated region
        $region41: #{tpu_custom_call.1} parent=31 // pred_check
          %p298 = pneg %p96
        $region42: #{tpu_custom_call.1} parent=31 // pred_check_branch
          %300 = sbr.rel (%p298) target = $region44
        $region43: #{tpu_custom_call.1} parent=31 // pred_region
          %s301 = sand.u32 %s24, 1
          %s302 = scalar_lea.sflag [#allocation7], %s301
          %s303 = sand.u32 %s86, 1
          %s304 = smul.addr %s303, 128
          %s305 = scalar_lea.vmem [#allocation8], %s304
          %s306 = smul.u32 16, %s24
          %308 = vsyncadd %s302, 0
          %s309 = smul.addr %s306, 8
          %s310 = scalar_lea.hbm %s2, %s309
          %s311 = sshll.u32 %s310, 4
          %s312 = int_to_ptr.hbm [resolvable:$true] %s311
          %s313 = sshll.u32 %s305, 4
          %s314 = int_to_ptr.vmem [resolvable:$true] %s313
          %319 = dma.hbm_to_vmem [thread:$0]  %s312, 2048, %s314, %s302, 128, 128, 8
        $region44: #{tpu_custom_call.1} parent=31 // pred_fallthru
          _
      $region32: #{tpu_custom_call.1} parent=5 // pred_fallthru
        _
      %p320 = scmp.le.s32.totalorder 1, %s24
      %p321 = scmp.lt.s32.totalorder %s24, 3
      %p322 = pnand %p320, %p321
      %p323 = pneg %p322
      // Predicated region
      $region45: #{tpu_custom_call.1} parent=5 // pred_check
        _
      $region46: #{tpu_custom_call.1} parent=5 // pred_check_branch
        %325 = sbr.rel (%p322) target = $region48
      $region47: #{tpu_custom_call.1} parent=5 // pred_region
        %s326 = ssub.s32 %s24, 1
        %s327 = sand.u32 %s37, 1
        %s328 = scalar_lea.sflag [#allocation4], %s327
        %s329 = sand.u32 %s37, 1
        %s330 = smul.addr %s329, 128
        %s331 = scalar_lea.vmem [#allocation3], %s330
        // Predicated region
        $region49: #{tpu_custom_call.1} parent=47 // pred_check
          %p332 = pneg %p50
        $region50: #{tpu_custom_call.1} parent=47 // pred_check_branch
          %334 = sbr.rel (%p332) target = $region52
        $region51: #{tpu_custom_call.1} parent=47 // pred_region
          %336 = dma.done %s328, 2048
        $region52: #{tpu_custom_call.1} parent=47 // pred_fallthru
          _
        %s337 = sand.u32 %s29, 1
        %s338 = scalar_lea.sflag [#allocation7], %s337
        %s339 = sand.u32 %s63, 1
        %s340 = smul.addr %s339, 128
        %s341 = scalar_lea.vmem [#allocation6], %s340
        // Predicated region
        $region53: #{tpu_custom_call.1} parent=47 // pred_check
          %p342 = pneg %p76
        $region54: #{tpu_custom_call.1} parent=47 // pred_check_branch
          %344 = sbr.rel (%p342) target = $region56
        $region55: #{tpu_custom_call.1} parent=47 // pred_region
          %346 = dma.done %s338, 2048
        $region56: #{tpu_custom_call.1} parent=47 // pred_fallthru
          _
        %s347 = sand.u32 %s29, 1
        %s348 = scalar_lea.sflag [#allocation7], %s347
        %s349 = sand.u32 %s89, 1
        %s350 = smul.addr %s349, 128
        %s351 = scalar_lea.vmem [#allocation8], %s350
        // Predicated region
        $region57: #{tpu_custom_call.1} parent=47 // pred_check
          %p352 = pneg %p102
        $region58: #{tpu_custom_call.1} parent=47 // pred_check_branch
          %354 = sbr.rel (%p352) target = $region60
        $region59: #{tpu_custom_call.1} parent=47 // pred_region
          %356 = dma.done %s348, 2048
        $region60: #{tpu_custom_call.1} parent=47 // pred_fallthru
          _
        // Predicated region
        $region61: #{tpu_custom_call.1} parent=47 // pred_check
          %p357 = pneg %p123
        $region62: #{tpu_custom_call.1} parent=47 // pred_check_branch
          %359 = sbr.rel (%p357) target = $region64
        $region63: #{tpu_custom_call.1} parent=47 // pred_region
          %361 = dma.done [#allocation10], 2048
        $region64: #{tpu_custom_call.1} parent=47 // pred_fallthru
          _
        %s362 = sand.u32 %s37, 1
        %s363 = scalar_lea.sflag [#allocation4], %s362
        %s364 = sand.u32 %s37, 1
        %s365 = smul.addr %s364, 128
        %s366 = scalar_lea.vmem [#allocation3], %s365
        %p367 = pneg %p50
        %p368 = pneg %p47
        %s369 = sand.u32 %s29, 1
        %s370 = scalar_lea.sflag [#allocation7], %s369
        %s371 = sand.u32 %s63, 1
        %s372 = smul.addr %s371, 128
        %s373 = scalar_lea.vmem [#allocation6], %s372
        %p374 = pneg %p76
        %p375 = pneg %p73
        %s376 = sand.u32 %s29, 1
        %s377 = scalar_lea.sflag [#allocation7], %s376
        %s378 = sand.u32 %s89, 1
        %s379 = smul.addr %s378, 128
        %s380 = scalar_lea.vmem [#allocation8], %s379
        %p381 = pneg %p102
        %p382 = pneg %p99
        %p383 = pneg %p123
        %p384 = pneg %p120
        %p385 = pneg %p144
        %p386 = pneg %p141
        %p387 = pneg %p165
        %p388 = pneg %p162
        %p389 = pneg %p186
        %p390 = pneg %p183
        %p391 = pneg %p212
        %p392 = pneg %p209
        %s393 = sand.u32 %s199, 1
        %s394 = scalar_lea.sflag [#allocation5], %s393
        %s395 = sand.u32 %s199, 1
        %s396 = smul.addr %s395, 128
        %s397 = scalar_lea.vmem [#allocation11], %s396
        %s398 = smul.u32 16, %s29
        %s399 = smul.u32 16, %s29
        %s400 = smul.u32 16, %s29
        %s401 = smul.u32 16, %s29
        %v402 = vld [vmem:[%s331] sm:$0xff]
        %v403 = vld [vmem:[%s331 + $0x8] sm:$0xff]
        %v404 = vld [vmem:[%s331 + $0x10] sm:$0xff]
        %v405 = vld [vmem:[%s331 + $0x18] sm:$0xff]
        %v406 = vld [vmem:[%s331 + $0x20] sm:$0xff]
        %v407 = vld [vmem:[%s331 + $0x28] sm:$0xff]
        %v408 = vld [vmem:[%s331 + $0x30] sm:$0xff]
        %v409 = vld [vmem:[%s331 + $0x38] sm:$0xff]
        %v410 = vld [vmem:[%s331 + $0x40] sm:$0xff]
        %v411 = vld [vmem:[%s331 + $0x48] sm:$0xff]
        %v412 = vld [vmem:[%s331 + $0x50] sm:$0xff]
        %v413 = vld [vmem:[%s331 + $0x58] sm:$0xff]
        %v414 = vld [vmem:[%s331 + $0x60] sm:$0xff]
        %v415 = vld [vmem:[%s331 + $0x68] sm:$0xff]
        %v416 = vld [vmem:[%s331 + $0x70] sm:$0xff]
        %v417 = vld [vmem:[%s331 + $0x78] sm:$0xff]
        %v418 = vld [vmem:[%s341] sm:$0xff]
        %v419 = vld [vmem:[%s341 + $0x8] sm:$0xff]
        %v420 = vld [vmem:[%s341 + $0x10] sm:$0xff]
        %v421 = vld [vmem:[%s341 + $0x18] sm:$0xff]
        %v422 = vld [vmem:[%s341 + $0x20] sm:$0xff]
        %v423 = vld [vmem:[%s341 + $0x28] sm:$0xff]
        %v424 = vld [vmem:[%s341 + $0x30] sm:$0xff]
        %v425 = vld [vmem:[%s341 + $0x38] sm:$0xff]
        %v426 = vld [vmem:[%s341 + $0x40] sm:$0xff]
        %v427 = vld [vmem:[%s341 + $0x48] sm:$0xff]
        %v428 = vld [vmem:[%s341 + $0x50] sm:$0xff]
        %v429 = vld [vmem:[%s341 + $0x58] sm:$0xff]
        %v430 = vld [vmem:[%s341 + $0x60] sm:$0xff]
        %v431 = vld [vmem:[%s341 + $0x68] sm:$0xff]
        %v432 = vld [vmem:[%s341 + $0x70] sm:$0xff]
        %v433 = vld [vmem:[%s341 + $0x78] sm:$0xff]
        %v434 = vld [vmem:[%s351] sm:$0xff]
        %v435 = vld [vmem:[%s351 + $0x8] sm:$0xff]
        %v436 = vld [vmem:[%s351 + $0x10] sm:$0xff]
        %v437 = vld [vmem:[%s351 + $0x18] sm:$0xff]
        %v438 = vld [vmem:[%s351 + $0x20] sm:$0xff]
        %v439 = vld [vmem:[%s351 + $0x28] sm:$0xff]
        %v440 = vld [vmem:[%s351 + $0x30] sm:$0xff]
        %v441 = vld [vmem:[%s351 + $0x38] sm:$0xff]
        %v442 = vld [vmem:[%s351 + $0x40] sm:$0xff]
        %v443 = vld [vmem:[%s351 + $0x48] sm:$0xff]
        %v444 = vld [vmem:[%s351 + $0x50] sm:$0xff]
        %v445 = vld [vmem:[%s351 + $0x58] sm:$0xff]
        %v446 = vld [vmem:[%s351 + $0x60] sm:$0xff]
        %v447 = vld [vmem:[%s351 + $0x68] sm:$0xff]
        %v448 = vld [vmem:[%s351 + $0x70] sm:$0xff]
        %v449 = vld [vmem:[%s351 + $0x78] sm:$0xff]
        %v450 = vld [vmem:[#allocation9] sm:$0xff]
        %v451 = vld [vmem:[#allocation9 + $0x8] sm:$0xff]
        %v452 = vld [vmem:[#allocation9 + $0x10] sm:$0xff]
        %v453 = vld [vmem:[#allocation9 + $0x18] sm:$0xff]
        %v454 = vld [vmem:[#allocation9 + $0x20] sm:$0xff]
        %v455 = vld [vmem:[#allocation9 + $0x28] sm:$0xff]
        %v456 = vld [vmem:[#allocation9 + $0x30] sm:$0xff]
        %v457 = vld [vmem:[#allocation9 + $0x38] sm:$0xff]
        %v458 = vld [vmem:[#allocation9 + $0x40] sm:$0xff]
        %v459 = vld [vmem:[#allocation9 + $0x48] sm:$0xff]
        %v460 = vld [vmem:[#allocation9 + $0x50] sm:$0xff]
        %v461 = vld [vmem:[#allocation9 + $0x58] sm:$0xff]
        %v462 = vld [vmem:[#allocation9 + $0x60] sm:$0xff]
        %v463 = vld [vmem:[#allocation9 + $0x68] sm:$0xff]
        %v464 = vld [vmem:[#allocation9 + $0x70] sm:$0xff]
        %v465 = vld [vmem:[#allocation9 + $0x78] sm:$0xff]
        %v466 = vld [vmem:[%s4] sm:$0x1]
        %v467 = vld [vmem:[%s5] sm:$0x1]
        %s468 = sld [smem:[#allocation2]]
        %v470 = vperm.slane %v466, 0
        %472 = vmatpush.msra.mxu0 %v465
        %473 = vmatpush.msra.mxu0 %v464
        %474 = vmatpush.msra.mxu0 %v463
        %475 = vmatpush.msra.mxu0 %v462
        %476 = vmatpush.msra.mxu0 %v461
        %477 = vmatpush.msra.mxu0 %v460
        %478 = vmatpush.msra.mxu0 %v459
        %479 = vmatpush.msra.mxu0 %v458
        %480 = vmatpush.msra.mxu0 %v457
        %481 = vmatpush.msra.mxu0 %v456
        %482 = vmatpush.msra.mxu0 %v455
        %483 = vmatpush.msra.mxu0 %v454
        %484 = vmatpush.msra.mxu0 %v453
        %485 = vmatpush.msra.mxu0 %v452
        %486 = vmatpush.msra.mxu0 %v451
        %487 = vmatpush.msra.mxu0 %v450
        %488 = vmatmul.f32.gmra.mxu0 %v402
        %v489 = vpop.f32.mrf.mxu0
        %v490 = vadd.f32 %v470, %v489
        %491 = vmatmul.f32.gmra.mxu0 %v403
        %v492 = vpop.f32.mrf.mxu0
        %v493 = vadd.f32 %v470, %v492
        %494 = vmatmul.f32.gmra.mxu0 %v404
        %v495 = vpop.f32.mrf.mxu0
        %v496 = vadd.f32 %v470, %v495
        %497 = vmatmul.f32.gmra.mxu0 %v405
        %v498 = vpop.f32.mrf.mxu0
        %v499 = vadd.f32 %v470, %v498
        %500 = vmatmul.f32.gmra.mxu0 %v406
        %v501 = vpop.f32.mrf.mxu0
        %v502 = vadd.f32 %v470, %v501
        %503 = vmatmul.f32.gmra.mxu0 %v407
        %v504 = vpop.f32.mrf.mxu0
        %v505 = vadd.f32 %v470, %v504
        %506 = vmatmul.f32.gmra.mxu0 %v408
        %v507 = vpop.f32.mrf.mxu0
        %v508 = vadd.f32 %v470, %v507
        %509 = vmatmul.f32.gmra.mxu0 %v409
        %v510 = vpop.f32.mrf.mxu0
        %v511 = vadd.f32 %v470, %v510
        %512 = vmatmul.f32.gmra.mxu0 %v410
        %v513 = vpop.f32.mrf.mxu0
        %v514 = vadd.f32 %v470, %v513
        %515 = vmatmul.f32.gmra.mxu0 %v411
        %v516 = vpop.f32.mrf.mxu0
        %v517 = vadd.f32 %v470, %v516
        %518 = vmatmul.f32.gmra.mxu0 %v412
        %v519 = vpop.f32.mrf.mxu0
        %v520 = vadd.f32 %v470, %v519
        %521 = vmatmul.f32.gmra.mxu0 %v413
        %v522 = vpop.f32.mrf.mxu0
        %v523 = vadd.f32 %v470, %v522
        %524 = vmatmul.f32.gmra.mxu0 %v414
        %v525 = vpop.f32.mrf.mxu0
        %v526 = vadd.f32 %v470, %v525
        %527 = vmatmul.f32.gmra.mxu0 %v415
        %v528 = vpop.f32.mrf.mxu0
        %v529 = vadd.f32 %v470, %v528
        %530 = vmatmul.f32.gmra.mxu0 %v416
        %v531 = vpop.f32.mrf.mxu0
        %v532 = vadd.f32 %v470, %v531
        %533 = vmatmul.f32.gmra.mxu0 %v417
        %v534 = vpop.f32.mrf.mxu0
        %v535 = vadd.f32 %v470, %v534
        %536 = vdwg.mxu0
        %v537 = vmax.f32 %v490, 0.0
        %v538 = vmax.f32 %v493, 0.0
        %v539 = vmax.f32 %v496, 0.0
        %v540 = vmax.f32 %v499, 0.0
        %v541 = vmax.f32 %v502, 0.0
        %v542 = vmax.f32 %v505, 0.0
        %v543 = vmax.f32 %v508, 0.0
        %v544 = vmax.f32 %v511, 0.0
        %v545 = vmax.f32 %v514, 0.0
        %v546 = vmax.f32 %v517, 0.0
        %v547 = vmax.f32 %v520, 0.0
        %v548 = vmax.f32 %v523, 0.0
        %v549 = vmax.f32 %v526, 0.0
        %v550 = vmax.f32 %v529, 0.0
        %v551 = vmax.f32 %v532, 0.0
        %v552 = vmax.f32 %v535, 0.0
        %v554 = vperm.slane %v467, 0
        %v556 = vmul.f32 %v537, %v554
        %v557 = vmul.f32 %v538, %v554
        %v558 = vmul.f32 %v539, %v554
        %v559 = vmul.f32 %v540, %v554
        %v560 = vmul.f32 %v541, %v554
        %v561 = vmul.f32 %v542, %v554
        %v562 = vmul.f32 %v543, %v554
        %v563 = vmul.f32 %v544, %v554
        %v564 = vmul.f32 %v545, %v554
        %v565 = vmul.f32 %v546, %v554
        %v566 = vmul.f32 %v547, %v554
        %v567 = vmul.f32 %v548, %v554
        %v568 = vmul.f32 %v549, %v554
        %v569 = vmul.f32 %v550, %v554
        %v570 = vmul.f32 %v551, %v554
        %v571 = vmul.f32 %v552, %v554
        %572 = vadd.xlane.f32.xlu0 %v556
        %v573 = vpop.xlane.xlu0 %572
        %574 = vadd.xlane.f32.xlu0 %v557
        %v575 = vpop.xlane.xlu0 %574
        %576 = vadd.xlane.f32.xlu0 %v558
        %v577 = vpop.xlane.xlu0 %576
        %578 = vadd.xlane.f32.xlu0 %v559
        %v579 = vpop.xlane.xlu0 %578
        %580 = vadd.xlane.f32.xlu0 %v560
        %v581 = vpop.xlane.xlu0 %580
        %582 = vadd.xlane.f32.xlu0 %v561
        %v583 = vpop.xlane.xlu0 %582
        %584 = vadd.xlane.f32.xlu0 %v562
        %v585 = vpop.xlane.xlu0 %584
        %586 = vadd.xlane.f32.xlu0 %v563
        %v587 = vpop.xlane.xlu0 %586
        %588 = vadd.xlane.f32.xlu0 %v564
        %v589 = vpop.xlane.xlu0 %588
        %590 = vadd.xlane.f32.xlu0 %v565
        %v591 = vpop.xlane.xlu0 %590
        %592 = vadd.xlane.f32.xlu0 %v566
        %v593 = vpop.xlane.xlu0 %592
        %594 = vadd.xlane.f32.xlu0 %v567
        %v595 = vpop.xlane.xlu0 %594
        %596 = vadd.xlane.f32.xlu0 %v568
        %v597 = vpop.xlane.xlu0 %596
        %598 = vadd.xlane.f32.xlu0 %v569
        %v599 = vpop.xlane.xlu0 %598
        %600 = vadd.xlane.f32.xlu0 %v570
        %v601 = vpop.xlane.xlu0 %600
        %602 = vadd.xlane.f32.xlu0 %v571
        %v603 = vpop.xlane.xlu0 %602
        %v604 = vstv %s468
        %v605 = vadd.f32 %v573, %v604
        %v606 = vadd.f32 %v575, %v604
        %v607 = vadd.f32 %v577, %v604
        %v608 = vadd.f32 %v579, %v604
        %v609 = vadd.f32 %v581, %v604
        %v610 = vadd.f32 %v583, %v604
        %v611 = vadd.f32 %v585, %v604
        %v612 = vadd.f32 %v587, %v604
        %v613 = vadd.f32 %v589, %v604
        %v614 = vadd.f32 %v591, %v604
        %v615 = vadd.f32 %v593, %v604
        %v616 = vadd.f32 %v595, %v604
        %v617 = vadd.f32 %v597, %v604
        %v618 = vadd.f32 %v599, %v604
        %v619 = vadd.f32 %v601, %v604
        %v620 = vadd.f32 %v603, %v604
        %v621 = vmul.f32 %v605, 0.088388346
        %v622 = vmul.f32 %v606, 0.088388346
        %v623 = vmul.f32 %v607, 0.088388346
        %v624 = vmul.f32 %v608, 0.088388346
        %v625 = vmul.f32 %v609, 0.088388346
        %v626 = vmul.f32 %v610, 0.088388346
        %v627 = vmul.f32 %v611, 0.088388346
        %v628 = vmul.f32 %v612, 0.088388346
        %v629 = vmul.f32 %v613, 0.088388346
        %v630 = vmul.f32 %v614, 0.088388346
        %v631 = vmul.f32 %v615, 0.088388346
        %v632 = vmul.f32 %v616, 0.088388346
        %v633 = vmul.f32 %v617, 0.088388346
        %v634 = vmul.f32 %v618, 0.088388346
        %v635 = vmul.f32 %v619, 0.088388346
        %v636 = vmul.f32 %v620, 0.088388346
        %637 = vmatpush.msra.mxu0 %v465
        %638 = vmatpush.msra.mxu0 %v464
        %639 = vmatpush.msra.mxu0 %v463
        %640 = vmatpush.msra.mxu0 %v462
        %641 = vmatpush.msra.mxu0 %v461
        %642 = vmatpush.msra.mxu0 %v460
        %643 = vmatpush.msra.mxu0 %v459
        %644 = vmatpush.msra.mxu0 %v458
        %645 = vmatpush.msra.mxu0 %v457
        %646 = vmatpush.msra.mxu0 %v456
        %647 = vmatpush.msra.mxu0 %v455
        %648 = vmatpush.msra.mxu0 %v454
        %649 = vmatpush.msra.mxu0 %v453
        %650 = vmatpush.msra.mxu0 %v452
        %651 = vmatpush.msra.mxu0 %v451
        %652 = vmatpush.msra.mxu0 %v450
        %653 = vmatmul.f32.gmra.mxu0 %v418
        %v654 = vpop.f32.mrf.mxu0
        %v655 = vadd.f32 %v470, %v654
        %656 = vmatmul.f32.gmra.mxu0 %v419
        %v657 = vpop.f32.mrf.mxu0
        %v658 = vadd.f32 %v470, %v657
        %659 = vmatmul.f32.gmra.mxu0 %v420
        %v660 = vpop.f32.mrf.mxu0
        %v661 = vadd.f32 %v470, %v660
        %662 = vmatmul.f32.gmra.mxu0 %v421
        %v663 = vpop.f32.mrf.mxu0
        %v664 = vadd.f32 %v470, %v663
        %665 = vmatmul.f32.gmra.mxu0 %v422
        %v666 = vpop.f32.mrf.mxu0
        %v667 = vadd.f32 %v470, %v666
        %668 = vmatmul.f32.gmra.mxu0 %v423
        %v669 = vpop.f32.mrf.mxu0
        %v670 = vadd.f32 %v470, %v669
        %671 = vmatmul.f32.gmra.mxu0 %v424
        %v672 = vpop.f32.mrf.mxu0
        %v673 = vadd.f32 %v470, %v672
        %674 = vmatmul.f32.gmra.mxu0 %v425
        %v675 = vpop.f32.mrf.mxu0
        %v676 = vadd.f32 %v470, %v675
        %677 = vmatmul.f32.gmra.mxu0 %v426
        %v678 = vpop.f32.mrf.mxu0
        %v679 = vadd.f32 %v470, %v678
        %680 = vmatmul.f32.gmra.mxu0 %v427
        %v681 = vpop.f32.mrf.mxu0
        %v682 = vadd.f32 %v470, %v681
        %683 = vmatmul.f32.gmra.mxu0 %v428
        %v684 = vpop.f32.mrf.mxu0
        %v685 = vadd.f32 %v470, %v684
        %686 = vmatmul.f32.gmra.mxu0 %v429
        %v687 = vpop.f32.mrf.mxu0
        %v688 = vadd.f32 %v470, %v687
        %689 = vmatmul.f32.gmra.mxu0 %v430
        %v690 = vpop.f32.mrf.mxu0
        %v691 = vadd.f32 %v470, %v690
        %692 = vmatmul.f32.gmra.mxu0 %v431
        %v693 = vpop.f32.mrf.mxu0
        %v694 = vadd.f32 %v470, %v693
        %695 = vmatmul.f32.gmra.mxu0 %v432
        %v696 = vpop.f32.mrf.mxu0
        %v697 = vadd.f32 %v470, %v696
        %698 = vmatmul.f32.gmra.mxu0 %v433
        %v699 = vpop.f32.mrf.mxu0
        %v700 = vadd.f32 %v470, %v699
        %701 = vdwg.mxu0
        %v702 = vmax.f32 %v655, 0.0
        %v703 = vmax.f32 %v658, 0.0
        %v704 = vmax.f32 %v661, 0.0
        %v705 = vmax.f32 %v664, 0.0
        %v706 = vmax.f32 %v667, 0.0
        %v707 = vmax.f32 %v670, 0.0
        %v708 = vmax.f32 %v673, 0.0
        %v709 = vmax.f32 %v676, 0.0
        %v710 = vmax.f32 %v679, 0.0
        %v711 = vmax.f32 %v682, 0.0
        %v712 = vmax.f32 %v685, 0.0
        %v713 = vmax.f32 %v688, 0.0
        %v714 = vmax.f32 %v691, 0.0
        %v715 = vmax.f32 %v694, 0.0
        %v716 = vmax.f32 %v697, 0.0
        %v717 = vmax.f32 %v700, 0.0
        %v718 = vmul.f32 %v702, %v554
        %v719 = vmul.f32 %v703, %v554
        %v720 = vmul.f32 %v704, %v554
        %v721 = vmul.f32 %v705, %v554
        %v722 = vmul.f32 %v706, %v554
        %v723 = vmul.f32 %v707, %v554
        %v724 = vmul.f32 %v708, %v554
        %v725 = vmul.f32 %v709, %v554
        %v726 = vmul.f32 %v710, %v554
        %v727 = vmul.f32 %v711, %v554
        %v728 = vmul.f32 %v712, %v554
        %v729 = vmul.f32 %v713, %v554
        %v730 = vmul.f32 %v714, %v554
        %v731 = vmul.f32 %v715, %v554
        %v732 = vmul.f32 %v716, %v554
        %v733 = vmul.f32 %v717, %v554
        %734 = vadd.xlane.f32.xlu0 %v718
        %v735 = vpop.xlane.xlu0 %734
        %736 = vadd.xlane.f32.xlu0 %v719
        %v737 = vpop.xlane.xlu0 %736
        %738 = vadd.xlane.f32.xlu0 %v720
        %v739 = vpop.xlane.xlu0 %738
        %740 = vadd.xlane.f32.xlu0 %v721
        %v741 = vpop.xlane.xlu0 %740
        %742 = vadd.xlane.f32.xlu0 %v722
        %v743 = vpop.xlane.xlu0 %742
        %744 = vadd.xlane.f32.xlu0 %v723
        %v745 = vpop.xlane.xlu0 %744
        %746 = vadd.xlane.f32.xlu0 %v724
        %v747 = vpop.xlane.xlu0 %746
        %748 = vadd.xlane.f32.xlu0 %v725
        %v749 = vpop.xlane.xlu0 %748
        %750 = vadd.xlane.f32.xlu0 %v726
        %v751 = vpop.xlane.xlu0 %750
        %752 = vadd.xlane.f32.xlu0 %v727
        %v753 = vpop.xlane.xlu0 %752
        %754 = vadd.xlane.f32.xlu0 %v728
        %v755 = vpop.xlane.xlu0 %754
        %756 = vadd.xlane.f32.xlu0 %v729
        %v757 = vpop.xlane.xlu0 %756
        %758 = vadd.xlane.f32.xlu0 %v730
        %v759 = vpop.xlane.xlu0 %758
        %760 = vadd.xlane.f32.xlu0 %v731
        %v761 = vpop.xlane.xlu0 %760
        %762 = vadd.xlane.f32.xlu0 %v732
        %v763 = vpop.xlane.xlu0 %762
        %764 = vadd.xlane.f32.xlu0 %v733
        %v765 = vpop.xlane.xlu0 %764
        %v766 = vadd.f32 %v735, %v604
        %v767 = vadd.f32 %v737, %v604
        %v768 = vadd.f32 %v739, %v604
        %v769 = vadd.f32 %v741, %v604
        %v770 = vadd.f32 %v743, %v604
        %v771 = vadd.f32 %v745, %v604
        %v772 = vadd.f32 %v747, %v604
        %v773 = vadd.f32 %v749, %v604
        %v774 = vadd.f32 %v751, %v604
        %v775 = vadd.f32 %v753, %v604
        %v776 = vadd.f32 %v755, %v604
        %v777 = vadd.f32 %v757, %v604
        %v778 = vadd.f32 %v759, %v604
        %v779 = vadd.f32 %v761, %v604
        %v780 = vadd.f32 %v763, %v604
        %v781 = vadd.f32 %v765, %v604
        %v782 = vmul.f32 %v766, 0.088388346
        %v783 = vmul.f32 %v767, 0.088388346
        %v784 = vmul.f32 %v768, 0.088388346
        %v785 = vmul.f32 %v769, 0.088388346
        %v786 = vmul.f32 %v770, 0.088388346
        %v787 = vmul.f32 %v771, 0.088388346
        %v788 = vmul.f32 %v772, 0.088388346
        %v789 = vmul.f32 %v773, 0.088388346
        %v790 = vmul.f32 %v774, 0.088388346
        %v791 = vmul.f32 %v775, 0.088388346
        %v792 = vmul.f32 %v776, 0.088388346
        %v793 = vmul.f32 %v777, 0.088388346
        %v794 = vmul.f32 %v778, 0.088388346
        %v795 = vmul.f32 %v779, 0.088388346
        %v796 = vmul.f32 %v780, 0.088388346
        %v797 = vmul.f32 %v781, 0.088388346
        %798 = vmatpush.msra.mxu0 %v465
        %799 = vmatpush.msra.mxu0 %v464
        %800 = vmatpush.msra.mxu0 %v463
        %801 = vmatpush.msra.mxu0 %v462
        %802 = vmatpush.msra.mxu0 %v461
        %803 = vmatpush.msra.mxu0 %v460
        %804 = vmatpush.msra.mxu0 %v459
        %805 = vmatpush.msra.mxu0 %v458
        %806 = vmatpush.msra.mxu0 %v457
        %807 = vmatpush.msra.mxu0 %v456
        %808 = vmatpush.msra.mxu0 %v455
        %809 = vmatpush.msra.mxu0 %v454
        %810 = vmatpush.msra.mxu0 %v453
        %811 = vmatpush.msra.mxu0 %v452
        %812 = vmatpush.msra.mxu0 %v451
        %813 = vmatpush.msra.mxu0 %v450
        %814 = vmatmul.f32.gmra.mxu0 %v434
        %v815 = vpop.f32.mrf.mxu0
        %v816 = vadd.f32 %v470, %v815
        %817 = vmatmul.f32.gmra.mxu0 %v435
        %v818 = vpop.f32.mrf.mxu0
        %v819 = vadd.f32 %v470, %v818
        %820 = vmatmul.f32.gmra.mxu0 %v436
        %v821 = vpop.f32.mrf.mxu0
        %v822 = vadd.f32 %v470, %v821
        %823 = vmatmul.f32.gmra.mxu0 %v437
        %v824 = vpop.f32.mrf.mxu0
        %v825 = vadd.f32 %v470, %v824
        %826 = vmatmul.f32.gmra.mxu0 %v438
        %v827 = vpop.f32.mrf.mxu0
        %v828 = vadd.f32 %v470, %v827
        %829 = vmatmul.f32.gmra.mxu0 %v439
        %v830 = vpop.f32.mrf.mxu0
        %v831 = vadd.f32 %v470, %v830
        %832 = vmatmul.f32.gmra.mxu0 %v440
        %v833 = vpop.f32.mrf.mxu0
        %v834 = vadd.f32 %v470, %v833
        %835 = vmatmul.f32.gmra.mxu0 %v441
        %v836 = vpop.f32.mrf.mxu0
        %v837 = vadd.f32 %v470, %v836
        %838 = vmatmul.f32.gmra.mxu0 %v442
        %v839 = vpop.f32.mrf.mxu0
        %v840 = vadd.f32 %v470, %v839
        %841 = vmatmul.f32.gmra.mxu0 %v443
        %v842 = vpop.f32.mrf.mxu0
        %v843 = vadd.f32 %v470, %v842
        %844 = vmatmul.f32.gmra.mxu0 %v444
        %v845 = vpop.f32.mrf.mxu0
        %v846 = vadd.f32 %v470, %v845
        %847 = vmatmul.f32.gmra.mxu0 %v445
        %v848 = vpop.f32.mrf.mxu0
        %v849 = vadd.f32 %v470, %v848
        %850 = vmatmul.f32.gmra.mxu0 %v446
        %v851 = vpop.f32.mrf.mxu0
        %v852 = vadd.f32 %v470, %v851
        %853 = vmatmul.f32.gmra.mxu0 %v447
        %v854 = vpop.f32.mrf.mxu0
        %v855 = vadd.f32 %v470, %v854
        %856 = vmatmul.f32.gmra.mxu0 %v448
        %v857 = vpop.f32.mrf.mxu0
        %v858 = vadd.f32 %v470, %v857
        %859 = vmatmul.f32.gmra.mxu0 %v449
        %v860 = vpop.f32.mrf.mxu0
        %v861 = vadd.f32 %v470, %v860
        %862 = vdwg.mxu0
        %v863 = vmax.f32 %v816, 0.0
        %v864 = vmax.f32 %v819, 0.0
        %v865 = vmax.f32 %v822, 0.0
        %v866 = vmax.f32 %v825, 0.0
        %v867 = vmax.f32 %v828, 0.0
        %v868 = vmax.f32 %v831, 0.0
        %v869 = vmax.f32 %v834, 0.0
        %v870 = vmax.f32 %v837, 0.0
        %v871 = vmax.f32 %v840, 0.0
        %v872 = vmax.f32 %v843, 0.0
        %v873 = vmax.f32 %v846, 0.0
        %v874 = vmax.f32 %v849, 0.0
        %v875 = vmax.f32 %v852, 0.0
        %v876 = vmax.f32 %v855, 0.0
        %v877 = vmax.f32 %v858, 0.0
        %v878 = vmax.f32 %v861, 0.0
        %v879 = vmul.f32 %v863, %v554
        %v880 = vmul.f32 %v864, %v554
        %v881 = vmul.f32 %v865, %v554
        %v882 = vmul.f32 %v866, %v554
        %v883 = vmul.f32 %v867, %v554
        %v884 = vmul.f32 %v868, %v554
        %v885 = vmul.f32 %v869, %v554
        %v886 = vmul.f32 %v870, %v554
        %v887 = vmul.f32 %v871, %v554
        %v888 = vmul.f32 %v872, %v554
        %v889 = vmul.f32 %v873, %v554
        %v890 = vmul.f32 %v874, %v554
        %v891 = vmul.f32 %v875, %v554
        %v892 = vmul.f32 %v876, %v554
        %v893 = vmul.f32 %v877, %v554
        %v894 = vmul.f32 %v878, %v554
        %895 = vadd.xlane.f32.xlu0 %v879
        %v896 = vpop.xlane.xlu0 %895
        %897 = vadd.xlane.f32.xlu0 %v880
        %v898 = vpop.xlane.xlu0 %897
        %899 = vadd.xlane.f32.xlu0 %v881
        %v900 = vpop.xlane.xlu0 %899
        %901 = vadd.xlane.f32.xlu0 %v882
        %v902 = vpop.xlane.xlu0 %901
        %903 = vadd.xlane.f32.xlu0 %v883
        %v904 = vpop.xlane.xlu0 %903
        %905 = vadd.xlane.f32.xlu0 %v884
        %v906 = vpop.xlane.xlu0 %905
        %907 = vadd.xlane.f32.xlu0 %v885
        %v908 = vpop.xlane.xlu0 %907
        %909 = vadd.xlane.f32.xlu0 %v886
        %v910 = vpop.xlane.xlu0 %909
        %911 = vadd.xlane.f32.xlu0 %v887
        %v912 = vpop.xlane.xlu0 %911
        %913 = vadd.xlane.f32.xlu0 %v888
        %v914 = vpop.xlane.xlu0 %913
        %915 = vadd.xlane.f32.xlu0 %v889
        %v916 = vpop.xlane.xlu0 %915
        %917 = vadd.xlane.f32.xlu0 %v890
        %v918 = vpop.xlane.xlu0 %917
        %919 = vadd.xlane.f32.xlu0 %v891
        %v920 = vpop.xlane.xlu0 %919
        %921 = vadd.xlane.f32.xlu0 %v892
        %v922 = vpop.xlane.xlu0 %921
        %923 = vadd.xlane.f32.xlu0 %v893
        %v924 = vpop.xlane.xlu0 %923
        %925 = vadd.xlane.f32.xlu0 %v894
        %v926 = vpop.xlane.xlu0 %925
        %v927 = vadd.f32 %v896, %v604
        %v928 = vadd.f32 %v898, %v604
        %v929 = vadd.f32 %v900, %v604
        %v930 = vadd.f32 %v902, %v604
        %v931 = vadd.f32 %v904, %v604
        %v932 = vadd.f32 %v906, %v604
        %v933 = vadd.f32 %v908, %v604
        %v934 = vadd.f32 %v910, %v604
        %v935 = vadd.f32 %v912, %v604
        %v936 = vadd.f32 %v914, %v604
        %v937 = vadd.f32 %v916, %v604
        %v938 = vadd.f32 %v918, %v604
        %v939 = vadd.f32 %v920, %v604
        %v940 = vadd.f32 %v922, %v604
        %v941 = vadd.f32 %v924, %v604
        %v942 = vadd.f32 %v926, %v604
        %v943 = vmul.f32 %v927, 0.088388346
        %v944 = vmul.f32 %v928, 0.088388346
        %v945 = vmul.f32 %v929, 0.088388346
        %v946 = vmul.f32 %v930, 0.088388346
        %v947 = vmul.f32 %v931, 0.088388346
        %v948 = vmul.f32 %v932, 0.088388346
        %v949 = vmul.f32 %v933, 0.088388346
        %v950 = vmul.f32 %v934, 0.088388346
        %v951 = vmul.f32 %v935, 0.088388346
        %v952 = vmul.f32 %v936, 0.088388346
        %v953 = vmul.f32 %v937, 0.088388346
        %v954 = vmul.f32 %v938, 0.088388346
        %v955 = vmul.f32 %v939, 0.088388346
        %v956 = vmul.f32 %v940, 0.088388346
        %v957 = vmul.f32 %v941, 0.088388346
        %v958 = vmul.f32 %v942, 0.088388346
        %v959 = vmax.f32 %v621, %v782
        %v960 = vmax.f32 %v622, %v783
        %v961 = vmax.f32 %v623, %v784
        %v962 = vmax.f32 %v624, %v785
        %v963 = vmax.f32 %v625, %v786
        %v964 = vmax.f32 %v626, %v787
        %v965 = vmax.f32 %v627, %v788
        %v966 = vmax.f32 %v628, %v789
        %v967 = vmax.f32 %v629, %v790
        %v968 = vmax.f32 %v630, %v791
        %v969 = vmax.f32 %v631, %v792
        %v970 = vmax.f32 %v632, %v793
        %v971 = vmax.f32 %v633, %v794
        %v972 = vmax.f32 %v634, %v795
        %v973 = vmax.f32 %v635, %v796
        %v974 = vmax.f32 %v636, %v797
        %v975 = vmax.f32 %v959, %v943
        %v976 = vmax.f32 %v960, %v944
        %v977 = vmax.f32 %v961, %v945
        %v978 = vmax.f32 %v962, %v946
        %v979 = vmax.f32 %v963, %v947
        %v980 = vmax.f32 %v964, %v948
        %v981 = vmax.f32 %v965, %v949
        %v982 = vmax.f32 %v966, %v950
        %v983 = vmax.f32 %v967, %v951
        %v984 = vmax.f32 %v968, %v952
        %v985 = vmax.f32 %v969, %v953
        %v986 = vmax.f32 %v970, %v954
        %v987 = vmax.f32 %v971, %v955
        %v988 = vmax.f32 %v972, %v956
        %v989 = vmax.f32 %v973, %v957
        %v990 = vmax.f32 %v974, %v958
        %v991 = vsub.f32 %v621, %v975
        %v992 = vsub.f32 %v622, %v976
        %v993 = vsub.f32 %v623, %v977
        %v994 = vsub.f32 %v624, %v978
        %v995 = vsub.f32 %v625, %v979
        %v996 = vsub.f32 %v626, %v980
        %v997 = vsub.f32 %v627, %v981
        %v998 = vsub.f32 %v628, %v982
        %v999 = vsub.f32 %v629, %v983
        %v1000 = vsub.f32 %v630, %v984
        %v1001 = vsub.f32 %v631, %v985
        %v1002 = vsub.f32 %v632, %v986
        %v1003 = vsub.f32 %v633, %v987
        %v1004 = vsub.f32 %v634, %v988
        %v1005 = vsub.f32 %v635, %v989
        %v1006 = vsub.f32 %v636, %v990
        %v1007 = vmul.f32 %v991, 1.442695
        %v1008 = vpow.pop %v1007
        %v1009 = vmul.f32 %v992, 1.442695
        %v1010 = vpow.pop %v1009
        %v1011 = vmul.f32 %v993, 1.442695
        %v1012 = vpow.pop %v1011
        %v1013 = vmul.f32 %v994, 1.442695
        %v1014 = vpow.pop %v1013
        %v1015 = vmul.f32 %v995, 1.442695
        %v1016 = vpow.pop %v1015
        %v1017 = vmul.f32 %v996, 1.442695
        %v1018 = vpow.pop %v1017
        %v1019 = vmul.f32 %v997, 1.442695
        %v1020 = vpow.pop %v1019
        %v1021 = vmul.f32 %v998, 1.442695
        %v1022 = vpow.pop %v1021
        %v1023 = vmul.f32 %v999, 1.442695
        %v1024 = vpow.pop %v1023
        %v1025 = vmul.f32 %v1000, 1.442695
        %v1026 = vpow.pop %v1025
        %v1027 = vmul.f32 %v1001, 1.442695
        %v1028 = vpow.pop %v1027
        %v1029 = vmul.f32 %v1002, 1.442695
        %v1030 = vpow.pop %v1029
        %v1031 = vmul.f32 %v1003, 1.442695
        %v1032 = vpow.pop %v1031
        %v1033 = vmul.f32 %v1004, 1.442695
        %v1034 = vpow.pop %v1033
        %v1035 = vmul.f32 %v1005, 1.442695
        %v1036 = vpow.pop %v1035
        %v1037 = vmul.f32 %v1006, 1.442695
        %v1038 = vpow.pop %v1037
        %v1039 = vsub.f32 %v782, %v975
        %v1040 = vsub.f32 %v783, %v976
        %v1041 = vsub.f32 %v784, %v977
        %v1042 = vsub.f32 %v785, %v978
        %v1043 = vsub.f32 %v786, %v979
        %v1044 = vsub.f32 %v787, %v980
        %v1045 = vsub.f32 %v788, %v981
        %v1046 = vsub.f32 %v789, %v982
        %v1047 = vsub.f32 %v790, %v983
        %v1048 = vsub.f32 %v791, %v984
        %v1049 = vsub.f32 %v792, %v985
        %v1050 = vsub.f32 %v793, %v986
        %v1051 = vsub.f32 %v794, %v987
        %v1052 = vsub.f32 %v795, %v988
        %v1053 = vsub.f32 %v796, %v989
        %v1054 = vsub.f32 %v797, %v990
        %v1055 = vmul.f32 %v1039, 1.442695
        %v1056 = vpow.pop %v1055
        %v1057 = vmul.f32 %v1040, 1.442695
        %v1058 = vpow.pop %v1057
        %v1059 = vmul.f32 %v1041, 1.442695
        %v1060 = vpow.pop %v1059
        %v1061 = vmul.f32 %v1042, 1.442695
        %v1062 = vpow.pop %v1061
        %v1063 = vmul.f32 %v1043, 1.442695
        %v1064 = vpow.pop %v1063
        %v1065 = vmul.f32 %v1044, 1.442695
        %v1066 = vpow.pop %v1065
        %v1067 = vmul.f32 %v1045, 1.442695
        %v1068 = vpow.pop %v1067
        %v1069 = vmul.f32 %v1046, 1.442695
        %v1070 = vpow.pop %v1069
        %v1071 = vmul.f32 %v1047, 1.442695
        %v1072 = vpow.pop %v1071
        %v1073 = vmul.f32 %v1048, 1.442695
        %v1074 = vpow.pop %v1073
        %v1075 = vmul.f32 %v1049, 1.442695
        %v1076 = vpow.pop %v1075
        %v1077 = vmul.f32 %v1050, 1.442695
        %v1078 = vpow.pop %v1077
        %v1079 = vmul.f32 %v1051, 1.442695
        %v1080 = vpow.pop %v1079
        %v1081 = vmul.f32 %v1052, 1.442695
        %v1082 = vpow.pop %v1081
        %v1083 = vmul.f32 %v1053, 1.442695
        %v1084 = vpow.pop %v1083
        %v1085 = vmul.f32 %v1054, 1.442695
        %v1086 = vpow.pop %v1085
        %v1087 = vsub.f32 %v943, %v975
        %v1088 = vsub.f32 %v944, %v976
        %v1089 = vsub.f32 %v945, %v977
        %v1090 = vsub.f32 %v946, %v978
        %v1091 = vsub.f32 %v947, %v979
        %v1092 = vsub.f32 %v948, %v980
        %v1093 = vsub.f32 %v949, %v981
        %v1094 = vsub.f32 %v950, %v982
        %v1095 = vsub.f32 %v951, %v983
        %v1096 = vsub.f32 %v952, %v984
        %v1097 = vsub.f32 %v953, %v985
        %v1098 = vsub.f32 %v954, %v986
        %v1099 = vsub.f32 %v955, %v987
        %v1100 = vsub.f32 %v956, %v988
        %v1101 = vsub.f32 %v957, %v989
        %v1102 = vsub.f32 %v958, %v990
        %v1103 = vmul.f32 %v1087, 1.442695
        %v1104 = vpow.pop %v1103
        %v1105 = vmul.f32 %v1088, 1.442695
        %v1106 = vpow.pop %v1105
        %v1107 = vmul.f32 %v1089, 1.442695
        %v1108 = vpow.pop %v1107
        %v1109 = vmul.f32 %v1090, 1.442695
        %v1110 = vpow.pop %v1109
        %v1111 = vmul.f32 %v1091, 1.442695
        %v1112 = vpow.pop %v1111
        %v1113 = vmul.f32 %v1092, 1.442695
        %v1114 = vpow.pop %v1113
        %v1115 = vmul.f32 %v1093, 1.442695
        %v1116 = vpow.pop %v1115
        %v1117 = vmul.f32 %v1094, 1.442695
        %v1118 = vpow.pop %v1117
        %v1119 = vmul.f32 %v1095, 1.442695
        %v1120 = vpow.pop %v1119
        %v1121 = vmul.f32 %v1096, 1.442695
        %v1122 = vpow.pop %v1121
        %v1123 = vmul.f32 %v1097, 1.442695
        %v1124 = vpow.pop %v1123
        %v1125 = vmul.f32 %v1098, 1.442695
        %v1126 = vpow.pop %v1125
        %v1127 = vmul.f32 %v1099, 1.442695
        %v1128 = vpow.pop %v1127
        %v1129 = vmul.f32 %v1100, 1.442695
        %v1130 = vpow.pop %v1129
        %v1131 = vmul.f32 %v1101, 1.442695
        %v1132 = vpow.pop %v1131
        %v1133 = vmul.f32 %v1102, 1.442695
        %v1134 = vpow.pop %v1133
        %v1135 = vadd.f32 %v1008, %v1056
        %v1136 = vadd.f32 %v1010, %v1058
        %v1137 = vadd.f32 %v1012, %v1060
        %v1138 = vadd.f32 %v1014, %v1062
        %v1139 = vadd.f32 %v1016, %v1064
        %v1140 = vadd.f32 %v1018, %v1066
        %v1141 = vadd.f32 %v1020, %v1068
        %v1142 = vadd.f32 %v1022, %v1070
        %v1143 = vadd.f32 %v1024, %v1072
        %v1144 = vadd.f32 %v1026, %v1074
        %v1145 = vadd.f32 %v1028, %v1076
        %v1146 = vadd.f32 %v1030, %v1078
        %v1147 = vadd.f32 %v1032, %v1080
        %v1148 = vadd.f32 %v1034, %v1082
        %v1149 = vadd.f32 %v1036, %v1084
        %v1150 = vadd.f32 %v1038, %v1086
        %v1151 = vadd.f32 %v1135, %v1104
        %v1152 = vadd.f32 %v1136, %v1106
        %v1153 = vadd.f32 %v1137, %v1108
        %v1154 = vadd.f32 %v1138, %v1110
        %v1155 = vadd.f32 %v1139, %v1112
        %v1156 = vadd.f32 %v1140, %v1114
        %v1157 = vadd.f32 %v1141, %v1116
        %v1158 = vadd.f32 %v1142, %v1118
        %v1159 = vadd.f32 %v1143, %v1120
        %v1160 = vadd.f32 %v1144, %v1122
        %v1161 = vadd.f32 %v1145, %v1124
        %v1162 = vadd.f32 %v1146, %v1126
        %v1163 = vadd.f32 %v1147, %v1128
        %v1164 = vadd.f32 %v1148, %v1130
        %v1165 = vadd.f32 %v1149, %v1132
        %v1166 = vadd.f32 %v1150, %v1134
        %v1167 = vrcp.pop %v1151
        %v1168 = vrcp.pop %v1152
        %v1169 = vrcp.pop %v1153
        %v1170 = vrcp.pop %v1154
        %v1171 = vrcp.pop %v1155
        %v1172 = vrcp.pop %v1156
        %v1173 = vrcp.pop %v1157
        %v1174 = vrcp.pop %v1158
        %v1175 = vrcp.pop %v1159
        %v1176 = vrcp.pop %v1160
        %v1177 = vrcp.pop %v1161
        %v1178 = vrcp.pop %v1162
        %v1179 = vrcp.pop %v1163
        %v1180 = vrcp.pop %v1164
        %v1181 = vrcp.pop %v1165
        %v1182 = vrcp.pop %v1166
        %v1183 = vmul.f32 %v1008, %v1167
        %v1184 = vmul.f32 %v1010, %v1168
        %v1185 = vmul.f32 %v1012, %v1169
        %v1186 = vmul.f32 %v1014, %v1170
        %v1187 = vmul.f32 %v1016, %v1171
        %v1188 = vmul.f32 %v1018, %v1172
        %v1189 = vmul.f32 %v1020, %v1173
        %v1190 = vmul.f32 %v1022, %v1174
        %v1191 = vmul.f32 %v1024, %v1175
        %v1192 = vmul.f32 %v1026, %v1176
        %v1193 = vmul.f32 %v1028, %v1177
        %v1194 = vmul.f32 %v1030, %v1178
        %v1195 = vmul.f32 %v1032, %v1179
        %v1196 = vmul.f32 %v1034, %v1180
        %v1197 = vmul.f32 %v1036, %v1181
        %v1198 = vmul.f32 %v1038, %v1182
        %v1199 = vmul.f32 %v1056, %v1167
        %v1200 = vmul.f32 %v1058, %v1168
        %v1201 = vmul.f32 %v1060, %v1169
        %v1202 = vmul.f32 %v1062, %v1170
        %v1203 = vmul.f32 %v1064, %v1171
        %v1204 = vmul.f32 %v1066, %v1172
        %v1205 = vmul.f32 %v1068, %v1173
        %v1206 = vmul.f32 %v1070, %v1174
        %v1207 = vmul.f32 %v1072, %v1175
        %v1208 = vmul.f32 %v1074, %v1176
        %v1209 = vmul.f32 %v1076, %v1177
        %v1210 = vmul.f32 %v1078, %v1178
        %v1211 = vmul.f32 %v1080, %v1179
        %v1212 = vmul.f32 %v1082, %v1180
        %v1213 = vmul.f32 %v1084, %v1181
        %v1214 = vmul.f32 %v1086, %v1182
        %v1215 = vmul.f32 %v1104, %v1167
        %v1216 = vmul.f32 %v1106, %v1168
        %v1217 = vmul.f32 %v1108, %v1169
        %v1218 = vmul.f32 %v1110, %v1170
        %v1219 = vmul.f32 %v1112, %v1171
        %v1220 = vmul.f32 %v1114, %v1172
        %v1221 = vmul.f32 %v1116, %v1173
        %v1222 = vmul.f32 %v1118, %v1174
        %v1223 = vmul.f32 %v1120, %v1175
        %v1224 = vmul.f32 %v1122, %v1176
        %v1225 = vmul.f32 %v1124, %v1177
        %v1226 = vmul.f32 %v1126, %v1178
        %v1227 = vmul.f32 %v1128, %v1179
        %v1228 = vmul.f32 %v1130, %v1180
        %v1229 = vmul.f32 %v1132, %v1181
        %v1230 = vmul.f32 %v1134, %v1182
        %v1231 = vmul.f32 %v402, %v1183
        %v1232 = vmul.f32 %v403, %v1184
        %v1233 = vmul.f32 %v404, %v1185
        %v1234 = vmul.f32 %v405, %v1186
        %v1235 = vmul.f32 %v406, %v1187
        %v1236 = vmul.f32 %v407, %v1188
        %v1237 = vmul.f32 %v408, %v1189
        %v1238 = vmul.f32 %v409, %v1190
        %v1239 = vmul.f32 %v410, %v1191
        %v1240 = vmul.f32 %v411, %v1192
        %v1241 = vmul.f32 %v412, %v1193
        %v1242 = vmul.f32 %v413, %v1194
        %v1243 = vmul.f32 %v414, %v1195
        %v1244 = vmul.f32 %v415, %v1196
        %v1245 = vmul.f32 %v416, %v1197
        %v1246 = vmul.f32 %v417, %v1198
        %v1247 = vmul.f32 %v418, %v1199
        %v1248 = vmul.f32 %v419, %v1200
        %v1249 = vmul.f32 %v420, %v1201
        %v1250 = vmul.f32 %v421, %v1202
        %v1251 = vmul.f32 %v422, %v1203
        %v1252 = vmul.f32 %v423, %v1204
        %v1253 = vmul.f32 %v424, %v1205
        %v1254 = vmul.f32 %v425, %v1206
        %v1255 = vmul.f32 %v426, %v1207
        %v1256 = vmul.f32 %v427, %v1208
        %v1257 = vmul.f32 %v428, %v1209
        %v1258 = vmul.f32 %v429, %v1210
        %v1259 = vmul.f32 %v430, %v1211
        %v1260 = vmul.f32 %v431, %v1212
        %v1261 = vmul.f32 %v432, %v1213
        %v1262 = vmul.f32 %v433, %v1214
        %v1263 = vadd.f32 %v1231, %v1247
        %v1264 = vadd.f32 %v1232, %v1248
        %v1265 = vadd.f32 %v1233, %v1249
        %v1266 = vadd.f32 %v1234, %v1250
        %v1267 = vadd.f32 %v1235, %v1251
        %v1268 = vadd.f32 %v1236, %v1252
        %v1269 = vadd.f32 %v1237, %v1253
        %v1270 = vadd.f32 %v1238, %v1254
        %v1271 = vadd.f32 %v1239, %v1255
        %v1272 = vadd.f32 %v1240, %v1256
        %v1273 = vadd.f32 %v1241, %v1257
        %v1274 = vadd.f32 %v1242, %v1258
        %v1275 = vadd.f32 %v1243, %v1259
        %v1276 = vadd.f32 %v1244, %v1260
        %v1277 = vadd.f32 %v1245, %v1261
        %v1278 = vadd.f32 %v1246, %v1262
        %v1279 = vmul.f32 %v434, %v1215
        %v1280 = vmul.f32 %v435, %v1216
        %v1281 = vmul.f32 %v436, %v1217
        %v1282 = vmul.f32 %v437, %v1218
        %v1283 = vmul.f32 %v438, %v1219
        %v1284 = vmul.f32 %v439, %v1220
        %v1285 = vmul.f32 %v440, %v1221
        %v1286 = vmul.f32 %v441, %v1222
        %v1287 = vmul.f32 %v442, %v1223
        %v1288 = vmul.f32 %v443, %v1224
        %v1289 = vmul.f32 %v444, %v1225
        %v1290 = vmul.f32 %v445, %v1226
        %v1291 = vmul.f32 %v446, %v1227
        %v1292 = vmul.f32 %v447, %v1228
        %v1293 = vmul.f32 %v448, %v1229
        %v1294 = vmul.f32 %v449, %v1230
        %v1295 = vadd.f32 %v1263, %v1279
        %v1296 = vadd.f32 %v1264, %v1280
        %v1297 = vadd.f32 %v1265, %v1281
        %v1298 = vadd.f32 %v1266, %v1282
        %v1299 = vadd.f32 %v1267, %v1283
        %v1300 = vadd.f32 %v1268, %v1284
        %v1301 = vadd.f32 %v1269, %v1285
        %v1302 = vadd.f32 %v1270, %v1286
        %v1303 = vadd.f32 %v1271, %v1287
        %v1304 = vadd.f32 %v1272, %v1288
        %v1305 = vadd.f32 %v1273, %v1289
        %v1306 = vadd.f32 %v1274, %v1290
        %v1307 = vadd.f32 %v1275, %v1291
        %v1308 = vadd.f32 %v1276, %v1292
        %v1309 = vadd.f32 %v1277, %v1293
        %v1310 = vadd.f32 %v1278, %v1294
        %1311 = vst [vmem:[%s397] sm:$0xff] %v1295
        %1312 = vst [vmem:[%s397 + $0x8] sm:$0xff] %v1296
        %1313 = vst [vmem:[%s397 + $0x10] sm:$0xff] %v1297
        %1314 = vst [vmem:[%s397 + $0x18] sm:$0xff] %v1298
        %1315 = vst [vmem:[%s397 + $0x20] sm:$0xff] %v1299
        %1316 = vst [vmem:[%s397 + $0x28] sm:$0xff] %v1300
        %1317 = vst [vmem:[%s397 + $0x30] sm:$0xff] %v1301
        %1318 = vst [vmem:[%s397 + $0x38] sm:$0xff] %v1302
        %1319 = vst [vmem:[%s397 + $0x40] sm:$0xff] %v1303
        %1320 = vst [vmem:[%s397 + $0x48] sm:$0xff] %v1304
        %1321 = vst [vmem:[%s397 + $0x50] sm:$0xff] %v1305
        %1322 = vst [vmem:[%s397 + $0x58] sm:$0xff] %v1306
        %1323 = vst [vmem:[%s397 + $0x60] sm:$0xff] %v1307
        %1324 = vst [vmem:[%s397 + $0x68] sm:$0xff] %v1308
        %1325 = vst [vmem:[%s397 + $0x70] sm:$0xff] %v1309
        %1326 = vst [vmem:[%s397 + $0x78] sm:$0xff] %v1310
        %s1327 = sand.u32 %s199, 1
        %s1328 = scalar_lea.sflag [#allocation5], %s1327
        %s1329 = sand.u32 %s199, 1
        %s1330 = smul.addr %s1329, 128
        %s1331 = scalar_lea.vmem [#allocation11], %s1330
        // Predicated region
        $region65: #{tpu_custom_call.1} parent=47 // pred_check
          %p1332 = pneg %p209
        $region66: #{tpu_custom_call.1} parent=47 // pred_check_branch
          %1334 = sbr.rel (%p1332) target = $region68
        $region67: #{tpu_custom_call.1} parent=47 // pred_region
          %s1335 = smul.u32 16, %s29
          %1337 = vsyncadd %s1328, 0
          %s1338 = smul.addr %s1335, 8
          %s1339 = scalar_lea.hbm %s7, %s1338
          %s1340 = sshll.u32 %s1331, 4
          %s1341 = int_to_ptr.vmem [resolvable:$true] %s1340
          %s1342 = sshll.u32 %s1339, 4
          %s1343 = int_to_ptr.hbm [resolvable:$true] %s1342
          %1348 = dma.vmem_to_hbm [thread:$0]  %s1341, 2048, %s1343, %s1328, 128, 128, 8
        $region68: #{tpu_custom_call.1} parent=47 // pred_fallthru
          _
      $region48: #{tpu_custom_call.1} parent=5 // pred_fallthru
        _
      %p1349 = scmp.le.s32.totalorder 2, %s24
      // Predicated region
      $region69: #{tpu_custom_call.1} parent=5 // pred_check
        %p1350 = pneg %p1349
      $region70: #{tpu_custom_call.1} parent=5 // pred_check_branch
        %1352 = sbr.rel (%p1350) target = $region72
      $region71: #{tpu_custom_call.1} parent=5 // pred_region
        %s1353 = ssub.s32 %s24, 2
        // Predicated region
        $region73: #{tpu_custom_call.1} parent=71 // pred_check
          %p1354 = pneg %p215
        $region74: #{tpu_custom_call.1} parent=71 // pred_check_branch
          %1356 = sbr.rel (%p1354) target = $region76
        $region75: #{tpu_custom_call.1} parent=71 // pred_region
          %s1357 = sand.u32 %s200, 1
          %s1358 = scalar_lea.sflag [#allocation5], %s1357
          %s1359 = sand.u32 %s200, 1
          %s1360 = smul.addr %s1359, 128
          %s1361 = scalar_lea.vmem [#allocation11], %s1360
          %1363 = dma.done %s1358, 2048
        $region76: #{tpu_custom_call.1} parent=71 // pred_fallthru
          _
      $region72: #{tpu_custom_call.1} parent=5 // pred_fallthru
        _
    $region6: #{tpu_custom_call.1} parent=1 // loop_footer
      %s28 = sadd.s32 1, %s24
    $region7: #{tpu_custom_call.1} parent=1 // loop_footer_branch
      %23 = sbr.rel target = $region3
    $region8: #{tpu_custom_call.1} parent=1 // loop_exit
      _
    %1364 = vsyncpa [#allocation4], 1
    %s1365 = scalar_lea.sflag [#allocation4], 1
    %1366 = vsyncpa %s1365, 1
    %1367 = vsyncpa [#allocation7], 1
    %s1368 = scalar_lea.sflag [#allocation7], 1
    %1369 = vsyncpa %s1368, 1
    %1370 = vsyncpa [#allocation10], 1
    %1371 = vsyncpa [#allocation5], 1
    %s1372 = scalar_lea.sflag [#allocation5], 1
    %1373 = vsyncpa %s1372, 1

</llo_original>
